<compile_context>
chip_gen: v6e
topology: v6e:2x2x1
jax: 0.10.0
libtpu: 0.0.40
codegen_flags: <defaults>
</compile_context>

<pallas_src>
import numpy as np
import jax
import jax.numpy as jnp
from jax.experimental import pallas as pl
from jax.experimental.pallas import tpu as pltpu

OUT_DIM = 128         # torch default 768, shrunk but kept 128-lane dense
FPN_CHANNELS = 128    # torchvision backbone.out_channels == 256, shrunk to 128
ROI_RES = 4           # torchvision box_roi_pool.output_size[0] == 7, shrunk
POOL_STRIDE = 4       # synthetic backbone spatial stride

HEAD_ROW_TILE = 16    # bf16-friendly sublane tile for head row axis
HEAD_K_TILE = 1024    # fc6 contraction tile (keeps VMEM bounded at real sizes)
PROJ_ROW_TILE = 128   # backbone projection row tile


# ----------------------- Pallas kernels (hot paths) -----------------------

def _backbone_proj_kernel(x0_ref, x1_ref, x2_ref, w_ref, b_ref, o_ref):
    # relu(sum_c x_c * w[c,:] + b) as three VPU multiply-adds; a K=3 MXU
    # matmul would leave >95% of the systolic array doing zero work.
    # Normalization is pre-folded into w/b by the wrapper.
    w = w_ref[...]
    acc = jnp.broadcast_to(b_ref[...], o_ref.shape)
    acc = acc + x0_ref[...] * w[0:1, :]
    acc = acc + x1_ref[...] * w[1:2, :]
    acc = acc + x2_ref[...] * w[2:3, :]
    o_ref[...] = jnp.maximum(acc, 0.0)


def _two_mlp_head_kernel(x_ref, w6_ref, b6_ref, w7_ref, b7_ref, o_ref, acc_ref):
    # fused relu(x @ W6 + b6) @ W7 + b7 -> relu, with the fc6 contraction (K)
    # tiled over grid axis 1 and accumulated in an f32 VMEM scratch.
    k = pl.program_id(1)

    @pl.when(k == 0)
    def _():
        acc_ref[...] = jnp.zeros_like(acc_ref)

    acc_ref[...] += jnp.dot(x_ref[...], w6_ref[...],
                            preferred_element_type=jnp.float32)

    @pl.when(k == pl.num_programs(1) - 1)
    def _():
        h = jnp.maximum(acc_ref[...] + b6_ref[...], 0.0).astype(w7_ref.dtype)
        o = jnp.dot(h, w7_ref[...], preferred_element_type=jnp.float32) + b7_ref[...]
        o_ref[...] = jnp.maximum(o, 0.0)


def backbone_projection(x2d, w, b, *, tm=PROJ_ROW_TILE):
    """(N, 3) pooled pixels -> relu((x - mean)/std @ W + b) with norm folded."""
    n, cin = x2d.shape
    cout = w.shape[1]
    n_pad = pl.cdiv(n, tm) * tm
    if n_pad != n:
        x2d = jnp.pad(x2d, ((0, n_pad - n), (0, 0)))
    cols = [x2d[:, c:c + 1] for c in range(cin)]          # three (N,1) columns
    col_spec = pl.BlockSpec((tm, 1), lambda i: (i, 0))
    out = pl.pallas_call(
        _backbone_proj_kernel,
        out_shape=jax.ShapeDtypeStruct((n_pad, cout), jnp.float32),
        grid_spec=pltpu.PrefetchScalarGridSpec(
            num_scalar_prefetch=0,
            grid=(n_pad // tm,),
            in_specs=[col_spec, col_spec, col_spec,
                      pl.BlockSpec((cin, cout), lambda i: (0, 0)),
                      pl.BlockSpec((1, cout), lambda i: (0, 0))],
            out_specs=pl.BlockSpec((tm, cout), lambda i: (i, 0)),
        ),
        compiler_params=pltpu.CompilerParams(dimension_semantics=("parallel",)),
    )(cols[0], cols[1], cols[2], w, b.reshape(1, -1))
    return out[:n]


def two_mlp_head(x, head_params, *, tm=HEAD_ROW_TILE, tk_max=HEAD_K_TILE):
    """TwoMLPHead.forward: flatten(start_dim=1) -> relu(fc6) -> relu(fc7)."""
    w6, b6, w7, b7 = head_params
    x = x.reshape(x.shape[0], -1).astype(jnp.float32)
    n, f = x.shape
    d = w7.shape[1]
    tk = tk_max if (f % tk_max == 0) else f               # K tile for fc6
    n_pad = pl.cdiv(n, tm) * tm
    if n_pad != n:
        x = jnp.pad(x, ((0, n_pad - n), (0, 0)))
    out = pl.pallas_call(
        _two_mlp_head_kernel,
        out_shape=jax.ShapeDtypeStruct((n_pad, d), jnp.float32),
        grid_spec=pltpu.PrefetchScalarGridSpec(
            num_scalar_prefetch=0,
            grid=(n_pad // tm, f // tk),
            in_specs=[pl.BlockSpec((tm, tk), lambda i, k: (i, k)),
                      pl.BlockSpec((tk, d), lambda i, k: (k, 0)),   # w6: K-tiled
                      pl.BlockSpec((1, d), lambda i, k: (0, 0)),    # b6 resident
                      pl.BlockSpec((d, d), lambda i, k: (0, 0)),    # w7 resident
                      pl.BlockSpec((1, d), lambda i, k: (0, 0))],   # b7 resident
            out_specs=pl.BlockSpec((tm, d), lambda i, k: (i, 0)),
            scratch_shapes=[pltpu.VMEM((tm, d), jnp.float32)],
        ),
        compiler_params=pltpu.CompilerParams(
            dimension_semantics=("parallel", "arbitrary")),
    )(x.astype(jnp.bfloat16),
      w6.astype(jnp.bfloat16), b6.reshape(1, -1).astype(jnp.float32),
      w7.astype(jnp.bfloat16), b7.reshape(1, -1).astype(jnp.float32))
    return out[:n]


# ----------------------------- JAX glue ops -------------------------------

def resize_boxes_jax(boxes, orig_hw, new_hw):
    ratio_h = new_hw[:, 0] / orig_hw[:, 0]
    ratio_w = new_hw[:, 1] / orig_hw[:, 1]
    xmin, ymin, xmax, ymax = boxes[:, 0], boxes[:, 1], boxes[:, 2], boxes[:, 3]
    return jnp.stack([xmin * ratio_w, ymin * ratio_h,
                      xmax * ratio_w, ymax * ratio_h], axis=1)


def get_normalize_boxes_feature_jax(boxes, orig_hw):
    ratio_h = 1.0 / orig_hw[:, 0]
    ratio_w = 1.0 / orig_hw[:, 1]
    xmin = boxes[:, 0] * ratio_w
    xmax = boxes[:, 2] * ratio_w
    ymin = boxes[:, 1] * ratio_h
    ymax = boxes[:, 3] * ratio_h
    w = xmax - xmin
    h = ymax - ymin
    a = w * h
    return jnp.stack([xmin, ymin, xmax, ymax, w, h, a], axis=1)


def roi_align_one(feat, box, out_size, spatial_scale):
    """Single-level ROI-Align (1 bilinear sample per bin) for one box."""
    C, Hf, Wf = feat.shape
    x1 = box[0] * spatial_scale
    y1 = box[1] * spatial_scale
    x2 = box[2] * spatial_scale
    y2 = box[3] * spatial_scale
    roi_w = jnp.maximum(x2 - x1, 1e-3)
    roi_h = jnp.maximum(y2 - y1, 1e-3)
    bin_w = roi_w / out_size
    bin_h = roi_h / out_size
    ys = y1 + (jnp.arange(out_size, dtype=jnp.float32) + 0.5) * bin_h
    xs = x1 + (jnp.arange(out_size, dtype=jnp.float32) + 0.5) * bin_w
    yy = jnp.broadcast_to(ys[:, None], (out_size, out_size))
    xx = jnp.broadcast_to(xs[None, :], (out_size, out_size))
    y0f = jnp.clip(jnp.floor(yy), 0.0, Hf - 1)
    x0f = jnp.clip(jnp.floor(xx), 0.0, Wf - 1)
    iy0 = y0f.astype(jnp.int32)
    ix0 = x0f.astype(jnp.int32)
    iy1 = jnp.clip(iy0 + 1, 0, Hf - 1)
    ix1 = jnp.clip(ix0 + 1, 0, Wf - 1)
    wy = jnp.clip(yy - y0f, 0.0, 1.0)
    wx = jnp.clip(xx - x0f, 0.0, 1.0)
    v00 = feat[:, iy0, ix0]
    v01 = feat[:, iy0, ix1]
    v10 = feat[:, iy1, ix0]
    v11 = feat[:, iy1, ix1]
    top = v00 * (1.0 - wx) + v01 * wx
    bot = v10 * (1.0 - wx) + v11 * wx
    return top * (1.0 - wy) + bot * wy    # (C, R, R)


def roi_align_batched(features, rois, roi_batch_idx, out_size, spatial_scale):
    # TODO(synk): torchvision MultiScaleRoIAlign (FPN level assignment,
    # sampling_ratio) reduced to single-level, one-sample-per-bin ROI-Align;
    # the data-dependent bilinear gather stays in XLA (one vmap over all ROIs
    # of all images), not Pallas.
    def one(box, bidx):
        return roi_align_one(features[bidx], box, out_size, spatial_scale)
    return jax.vmap(one)(rois, roi_batch_idx)   # (N_rois, C, R, R)


# ------------------------------ jitted core --------------------------------

@jax.jit
def _forward_core(params, images, tgt_boxes, tgt_batch_idx, image_hw, img_locations):
    B, C, H, W = images.shape
    n_boxes = tgt_boxes.shape[0]

    # Fold per-channel normalization into the 1x1-conv weights (exact: norm
    # and the avg-pool are affine/linear per input channel), so no separate
    # normalize kernel and no extra HBM pass over the image tensor.
    inv_std = 1.0 / params["std"]
    w_fold = params["conv_w"] * inv_std[:, None]
    b_fold = params["conv_b"] - (params["mean"] * inv_std) @ params["conv_w"]

    # TODO(synk): pretrained ResNet50-FPN backbone + GeneralizedRCNNTransform
    # resize replaced by a synthetic stride-4 avg-pool + 1x1 conv + ReLU
    # (image_sizes == original sizes); the pool/transpose stays in XLA.
    Hp, Wp = H // POOL_STRIDE, W // POOL_STRIDE
    xp = images.reshape(B, C, Hp, POOL_STRIDE, Wp, POOL_STRIDE).mean(axis=(3, 5))
    x2d = xp.transpose(0, 2, 3, 1).reshape(B * Hp * Wp, C)
    y2d = backbone_projection(x2d, w_fold, b_fold)
    features = y2d.reshape(B, Hp, Wp, FPN_CHANNELS).transpose(0, 3, 1, 2)
    spatial_scale = 1.0 / POOL_STRIDE

    hw_per_box = image_hw[tgt_batch_idx]                       # (N, 2)
    boxes_resized = resize_boxes_jax(tgt_boxes, hw_per_box, hw_per_box)
    boxes_locations = get_normalize_boxes_feature_jax(tgt_boxes, hw_per_box)

    img_boxes = jnp.stack([jnp.zeros((B,), jnp.float32),
                           jnp.zeros((B,), jnp.float32),
                           image_hw[:, 0] - 1.0,
                           image_hw[:, 1] - 1.0], axis=1)

    # One batched ROI-Align over target boxes + whole-image boxes.
    all_rois = jnp.concatenate([boxes_resized, img_boxes], axis=0)
    all_bidx = jnp.concatenate(
        [tgt_batch_idx, jnp.arange(B, dtype=jnp.int32)], axis=0)
    pooled = roi_align_batched(features, all_rois, all_bidx, ROI_RES, spatial_scale)
    pooled = pooled.reshape(pooled.shape[0], -1)               # flatten(start_dim=1)

    box_feats = two_mlp_head(pooled[:n_boxes], params["box_head"])
    img_feats = two_mlp_head(pooled[n_boxes:], params["feature_head"])

    # box_location_head is shared between target boxes and whole images ->
    # one fused head call on the concatenated (N+B, 7) input.
    loc_in = jnp.concatenate([boxes_locations, img_locations], axis=0)
    loc_out = two_mlp_head(loc_in, params["box_location_head"])

    return {
        "img_features": img_feats,
        "box_features_all": box_feats,
        "img_location_features": loc_out[n_boxes:],
        "box_location_features_all": loc_out[:n_boxes],
    }


# ----------------------------- parameters ---------------------------------

def init_params(key):
    ks = jax.random.split(key, 14)

    def linear(kw, kb, fan_in, fan_out):
        bound = 1.0 / np.sqrt(fan_in)
        w = jax.random.uniform(kw, (fan_in, fan_out), jnp.float32, -bound, bound)
        b = jax.random.uniform(kb, (fan_out,), jnp.float32, -bound, bound)
        return w, b

    head_in = FPN_CHANNELS * ROI_RES * ROI_RES
    params = {
        "mean": jnp.array([0.485, 0.456, 0.406], jnp.float32),
        "std": jnp.array([0.229, 0.224, 0.225], jnp.float32),
    }
    params["conv_w"], params["conv_b"] = linear(ks[0], ks[1], 3, FPN_CHANNELS)
    params["box_head"] = linear(ks[2], ks[3], head_in, OUT_DIM) + linear(ks[4], ks[5], OUT_DIM, OUT_DIM)
    params["feature_head"] = linear(ks[6], ks[7], head_in, OUT_DIM) + linear(ks[8], ks[9], OUT_DIM, OUT_DIM)
    params["box_location_head"] = linear(ks[10], ks[11], 7, OUT_DIM) + linear(ks[12], ks[13], OUT_DIM, OUT_DIM)
    return params


# ------------------------------- forward ----------------------------------

def faster_rcnn_feature_forward(images, targets, params):
    original_image_sizes = []
    img_locations_list = []
    for img in images:
        h, w = int(img.shape[-2]), int(img.shape[-1])
        original_image_sizes.append((h, w))
        img_locations_list.append([0, 0, 1, 1, 1, 1, 1])
    img_locations = jnp.array(img_locations_list, dtype=jnp.float32)

    # TODO(synk): GeneralizedRCNNTransform's min/max-size resize and padded
    # batching omitted: same-size images assumed, image_sizes == original.
    image_hw = jnp.array(original_image_sizes, dtype=jnp.float32)
    x = jnp.stack(images).astype(jnp.float32)                  # (B, 3, H, W)

    counts, batch_idx = [], []
    for ti, target in enumerate(targets):
        nb = int(target["boxes"].shape[0])
        counts.append(nb)
        batch_idx.extend([ti] * nb)
    tgt_boxes = jnp.concatenate(
        [t["boxes"].astype(jnp.float32) for t in targets], axis=0)
    tgt_batch_idx = jnp.array(batch_idx, dtype=jnp.int32)

    out = _forward_core(params, x, tgt_boxes, tgt_batch_idx, image_hw, img_locations)

    box_feats = out["box_features_all"]
    box_loc_feats = out["box_location_features_all"]
    box_features, box_location_features = [], []
    start = 0
    for nb in counts:
        box_features.append(box_feats[start:start + nb])
        box_location_features.append(box_loc_feats[start:start + nb])
        start += nb

    return {
        "img_features": out["img_features"],
        "box_features": box_features,
        "img_location_features": out["img_location_features"],
        "box_location_features": box_location_features,
    }


if __name__ == "__main__":
    key = jax.random.PRNGKey(0)
    pkey, ikey = jax.random.split(key)
    params = init_params(pkey)

    ik0, ik1 = jax.random.split(ikey)
    images = [
        jax.random.uniform(ik0, (3, 32, 32), jnp.float32),
        jax.random.uniform(ik1, (3, 32, 32), jnp.float32),
    ]
    targets = [
        {"boxes": jnp.array([[2.0, 3.0, 20.0, 25.0],
                             [5.0, 5.0, 30.0, 30.0],
                             [0.0, 0.0, 15.0, 10.0]], jnp.float32)},
        {"boxes": jnp.array([[1.0, 1.0, 10.0, 12.0],
                             [8.0, 4.0, 28.0, 22.0]], jnp.float32)},
    ]

    out = faster_rcnn_feature_forward(images, targets, params)
    jax.block_until_ready(out)

    assert out["img_features"].shape == (2, OUT_DIM)
    assert out["img_location_features"].shape == (2, OUT_DIM)
    assert [t.shape for t in out["box_features"]] == [(3, OUT_DIM), (2, OUT_DIM)]
    assert [t.shape for t in out["box_location_features"]] == [(3, OUT_DIM), (2, OUT_DIM)]
    assert all(bool(jnp.all(jnp.isfinite(v))) for v in
               [out["img_features"], out["img_location_features"]] +
               out["box_features"] + out["box_location_features"])
    print("KERNEL_OK")
</pallas_src>

<mosaic_0001>
module attributes {stable_mosaic.version = 11 : i64} {
  func.func @_backbone_proj_kernel(%arg0: i32, %arg1: memref<128x1xf32, #tpu.memory_space<vmem>>, %arg2: memref<128x1xf32, #tpu.memory_space<vmem>>, %arg3: memref<128x1xf32, #tpu.memory_space<vmem>>, %arg4: memref<3x128xf32, #tpu.memory_space<vmem>>, %arg5: memref<1x128xf32, #tpu.memory_space<vmem>>, %arg6: memref<128x128xf32, #tpu.memory_space<vmem>>) attributes {dimension_semantics = [#tpu.dimension_semantics<parallel>], iteration_bounds = array<i64: 1>, scalar_prefetch = 0 : i64, scratch_operands = 0 : i64, tpu.core_type = #tpu.core_type<tc>, window_params = [{transform_indices = @transform_0, window_bounds = array<i64: 128, 1>}, {transform_indices = @transform_1, window_bounds = array<i64: 128, 1>}, {transform_indices = @transform_2, window_bounds = array<i64: 128, 1>}, {pipeline_mode = #tpu.pipeline_mode<synchronous>, transform_indices = @transform_3, window_bounds = array<i64: 3, 128>}, {pipeline_mode = #tpu.pipeline_mode<synchronous>, transform_indices = @transform_4, window_bounds = array<i64: 1, 128>}, {transform_indices = @transform_5, window_bounds = array<i64: 128, 128>}]} {
    %c0 = arith.constant 0 : index
    %c0_0 = arith.constant 0 : index
    %0 = vector.load %arg4[%c0, %c0_0] : memref<3x128xf32, #tpu.memory_space<vmem>>, vector<3x128xf32>
    %c0_1 = arith.constant 0 : index
    %c0_2 = arith.constant 0 : index
    %1 = vector.load %arg5[%c0_1, %c0_2] : memref<1x128xf32, #tpu.memory_space<vmem>>, vector<1x128xf32>
    %2 = vector.shape_cast %1 : vector<1x128xf32> to vector<1x128xf32>
    %3 = vector.broadcast %2 : vector<1x128xf32> to vector<128x128xf32>
    %c0_3 = arith.constant 0 : index
    %c0_4 = arith.constant 0 : index
    %4 = vector.load %arg1[%c0_3, %c0_4] : memref<128x1xf32, #tpu.memory_space<vmem>>, vector<128x1xf32>
    %5 = vector.extract_strided_slice %0 {offsets = [0, 0], sizes = [1, 128], strides = [1, 1]} : vector<3x128xf32> to vector<1x128xf32>
    %6 = vector.broadcast %4 : vector<128x1xf32> to vector<128x128xf32>
    %7 = vector.broadcast %5 : vector<1x128xf32> to vector<128x128xf32>
    %8 = arith.mulf %6, %7 : vector<128x128xf32>
    %9 = arith.addf %3, %8 : vector<128x128xf32>
    %c0_5 = arith.constant 0 : index
    %c0_6 = arith.constant 0 : index
    %10 = vector.load %arg2[%c0_5, %c0_6] : memref<128x1xf32, #tpu.memory_space<vmem>>, vector<128x1xf32>
    %11 = vector.extract_strided_slice %0 {offsets = [1, 0], sizes = [1, 128], strides = [1, 1]} : vector<3x128xf32> to vector<1x128xf32>
    %12 = vector.broadcast %10 : vector<128x1xf32> to vector<128x128xf32>
    %13 = vector.broadcast %11 : vector<1x128xf32> to vector<128x128xf32>
    %14 = arith.mulf %12, %13 : vector<128x128xf32>
    %15 = arith.addf %9, %14 : vector<128x128xf32>
    %c0_7 = arith.constant 0 : index
    %c0_8 = arith.constant 0 : index
    %16 = vector.load %arg3[%c0_7, %c0_8] : memref<128x1xf32, #tpu.memory_space<vmem>>, vector<128x1xf32>
    %17 = vector.extract_strided_slice %0 {offsets = [2, 0], sizes = [1, 128], strides = [1, 1]} : vector<3x128xf32> to vector<1x128xf32>
    %18 = vector.broadcast %16 : vector<128x1xf32> to vector<128x128xf32>
    %19 = vector.broadcast %17 : vector<1x128xf32> to vector<128x128xf32>
    %20 = arith.mulf %18, %19 : vector<128x128xf32>
    %21 = arith.addf %15, %20 : vector<128x128xf32>
    %cst = arith.constant 0.000000e+00 : f32
    %22 = vector.broadcast %cst : f32 to vector<128x128xf32>
    %23 = arith.maximumf %21, %22 : vector<128x128xf32>
    %c0_9 = arith.constant 0 : index
    %c0_10 = arith.constant 0 : index
    %24 = vector.load %arg6[%c0_9, %c0_10] : memref<128x128xf32, #tpu.memory_space<vmem>>, vector<128x128xf32>
    tpu.vector_store %arg6[%c0_9, %c0_10], %23 {strides = array<i32>} : memref<128x128xf32, #tpu.memory_space<vmem>>, vector<128x128xf32>,
    return
  }
  func.func @transform_0(%arg0: i32) -> (i32, i32) {
    %c0_i32 = arith.constant 0 : i32
    %c0_i32_0 = arith.constant 0 : i32
    return %arg0, %c0_i32 : i32, i32
  }
  func.func @transform_1(%arg0: i32) -> (i32, i32) {
    %c0_i32 = arith.constant 0 : i32
    %c0_i32_0 = arith.constant 0 : i32
    return %arg0, %c0_i32 : i32, i32
  }
  func.func @transform_2(%arg0: i32) -> (i32, i32) {
    %c0_i32 = arith.constant 0 : i32
    %c0_i32_0 = arith.constant 0 : i32
    return %arg0, %c0_i32 : i32, i32
  }
  func.func @transform_3(%arg0: i32) -> (i32, i32) {
    %c0_i32 = arith.constant 0 : i32
    %c0_i32_0 = arith.constant 0 : i32
    %c0_i32_1 = arith.constant 0 : i32
    return %c0_i32, %c0_i32_0 : i32, i32
  }
  func.func @transform_4(%arg0: i32) -> (i32, i32) {
    %c0_i32 = arith.constant 0 : i32
    %c0_i32_0 = arith.constant 0 : i32
    %c0_i32_1 = arith.constant 0 : i32
    return %c0_i32, %c0_i32_0 : i32, i32
  }
  func.func @transform_5(%arg0: i32) -> (i32, i32) {
    %c0_i32 = arith.constant 0 : i32
    %c0_i32_0 = arith.constant 0 : i32
    return %arg0, %c0_i32 : i32, i32
  }
}

module attributes {stable_mosaic.version = 11 : i64} {
  func.func @_two_mlp_head_kernel(%arg0: i32, %arg1: i32, %arg2: memref<16x1024xbf16, #tpu.memory_space<vmem>>, %arg3: memref<1024x128xbf16, #tpu.memory_space<vmem>>, %arg4: memref<1x128xf32, #tpu.memory_space<vmem>>, %arg5: memref<128x128xbf16, #tpu.memory_space<vmem>>, %arg6: memref<1x128xf32, #tpu.memory_space<vmem>>, %arg7: memref<16x128xf32, #tpu.memory_space<vmem>>, %arg8: memref<16x128xf32, #tpu.memory_space<vmem>>) attributes {dimension_semantics = [#tpu.dimension_semantics<parallel>, #tpu.dimension_semantics<arbitrary>], iteration_bounds = array<i64: 1, 2>, scalar_prefetch = 0 : i64, scratch_operands = 1 : i64, tpu.core_type = #tpu.core_type<tc>, window_params = [{transform_indices = @transform_0, window_bounds = array<i64: 16, 1024>}, {transform_indices = @transform_1, window_bounds = array<i64: 1024, 128>}, {pipeline_mode = #tpu.pipeline_mode<synchronous>, transform_indices = @transform_2, window_bounds = array<i64: 1, 128>}, {pipeline_mode = #tpu.pipeline_mode<synchronous>, transform_indices = @transform_3, window_bounds = array<i64: 128, 128>}, {pipeline_mode = #tpu.pipeline_mode<synchronous>, transform_indices = @transform_4, window_bounds = array<i64: 1, 128>}, {transform_indices = @transform_5, window_bounds = array<i64: 16, 128>}]} {
    %c0_i32 = arith.constant 0 : i32
    %0 = arith.cmpi eq, %arg1, %c0_i32 : i32
    %1 = arith.extui %0 : i1 to i32
    %c0_i32_0 = arith.constant 0 : i32
    %2 = arith.cmpi ne, %1, %c0_i32_0 : i32
    scf.if %2 {
      %cst_9 = arith.constant 0.000000e+00 : f32
      %12 = vector.broadcast %cst_9 : f32 to vector<16x128xf32>
      %c0_10 = arith.constant 0 : index
      %c0_11 = arith.constant 0 : index
      %13 = vector.load %arg8[%c0_10, %c0_11] : memref<16x128xf32, #tpu.memory_space<vmem>>, vector<16x128xf32>
      tpu.vector_store %arg8[%c0_10, %c0_11], %12 {strides = array<i32>} : memref<16x128xf32, #tpu.memory_space<vmem>>, vector<16x128xf32>,
    } else {
    }
    %c0 = arith.constant 0 : index
    %c0_1 = arith.constant 0 : index
    %3 = vector.load %arg8[%c0, %c0_1] : memref<16x128xf32, #tpu.memory_space<vmem>>, vector<16x128xf32>
    %c0_2 = arith.constant 0 : index
    %c0_3 = arith.constant 0 : index
    %4 = vector.load %arg2[%c0_2, %c0_3] : memref<16x1024xbf16, #tpu.memory_space<vmem>>, vector<16x1024xbf16>
    %c0_4 = arith.constant 0 : index
    %c0_5 = arith.constant 0 : index
    %5 = vector.load %arg3[%c0_4, %c0_5] : memref<1024x128xbf16, #tpu.memory_space<vmem>>, vector<1024x128xbf16>
    %cst = arith.constant dense<0.000000e+00> : vector<16x128xf32>
    %6 = tpu.matmul %4, %5, %cst {dimension_numbers = #tpu.dot_dimension_numbers<[1], [0], [0], [1], [0, 0, 1, 1], [], []>} : vector<16x1024xbf16>, vector<1024x128xbf16>, vector<16x128xf32> -> vector<16x128xf32>
    %7 = arith.addf %3, %6 : vector<16x128xf32>
    %c0_6 = arith.constant 0 : index
    %c0_7 = arith.constant 0 : index
    %8 = vector.load %arg8[%c0_6, %c0_7] : memref<16x128xf32, #tpu.memory_space<vmem>>, vector<16x128xf32>
    tpu.vector_store %arg8[%c0_6, %c0_7], %7 {strides = array<i32>} : memref<16x128xf32, #tpu.memory_space<vmem>>, vector<16x128xf32>,
    %c1_i32 = arith.constant 1 : i32
    %9 = arith.cmpi eq, %arg1, %c1_i32 : i32
    %10 = arith.extui %9 : i1 to i32
    %c0_i32_8 = arith.constant 0 : i32
    %11 = arith.cmpi ne, %10, %c0_i32_8 : i32
    scf.if %11 {
      %c0_9 = arith.constant 0 : index
      %c0_10 = arith.constant 0 : index
      %12 = vector.load %arg8[%c0_9, %c0_10] : memref<16x128xf32, #tpu.memory_space<vmem>>, vector<16x128xf32>
      %c0_11 = arith.constant 0 : index
      %c0_12 = arith.constant 0 : index
      %13 = vector.load %arg4[%c0_11, %c0_12] : memref<1x128xf32, #tpu.memory_space<vmem>>, vector<1x128xf32>
      %14 = vector.broadcast %13 : vector<1x128xf32> to vector<16x128xf32>
      %15 = arith.addf %12, %14 : vector<16x128xf32>
      %cst_13 = arith.constant 0.000000e+00 : f32
      %16 = vector.broadcast %cst_13 : f32 to vector<16x128xf32>
      %17 = arith.maximumf %15, %16 : vector<16x128xf32>
      %18 = arith.truncf %17 : vector<16x128xf32> to vector<16x128xbf16>
      %c0_14 = arith.constant 0 : index
      %c0_15 = arith.constant 0 : index
      %19 = vector.load %arg5[%c0_14, %c0_15] : memref<128x128xbf16, #tpu.memory_space<vmem>>, vector<128x128xbf16>
      %cst_16 = arith.constant dense<0.000000e+00> : vector<16x128xf32>
      %20 = tpu.matmul %18, %19, %cst_16 {dimension_numbers = #tpu.dot_dimension_numbers<[1], [0], [0], [1], [0, 0, 1, 1], [], []>} : vector<16x128xbf16>, vector<128x128xbf16>, vector<16x128xf32> -> vector<16x128xf32>
      %c0_17 = arith.constant 0 : index
      %c0_18 = arith.constant 0 : index
      %21 = vector.load %arg6[%c0_17, %c0_18] : memref<1x128xf32, #tpu.memory_space<vmem>>, vector<1x128xf32>
      %22 = vector.broadcast %21 : vector<1x128xf32> to vector<16x128xf32>
      %23 = arith.addf %20, %22 : vector<16x128xf32>
      %cst_19 = arith.constant 0.000000e+00 : f32
      %24 = vector.broadcast %cst_19 : f32 to vector<16x128xf32>
      %25 = arith.maximumf %23, %24 : vector<16x128xf32>
      %c0_20 = arith.constant 0 : index
      %c0_21 = arith.constant 0 : index
      %26 = vector.load %arg7[%c0_20, %c0_21] : memref<16x128xf32, #tpu.memory_space<vmem>>, vector<16x128xf32>
      tpu.vector_store %arg7[%c0_20, %c0_21], %25 {strides = array<i32>} : memref<16x128xf32, #tpu.memory_space<vmem>>, vector<16x128xf32>,
    } else {
    }
    return
  }
  func.func @transform_0(%arg0: i32, %arg1: i32) -> (i32, i32) {
    %c0_i32 = arith.constant 0 : i32
    return %arg0, %arg1 : i32, i32
  }
  func.func @transform_1(%arg0: i32, %arg1: i32) -> (i32, i32) {
    %c0_i32 = arith.constant 0 : i32
    %c0_i32_0 = arith.constant 0 : i32
    return %arg1, %c0_i32 : i32, i32
  }
  func.func @transform_2(%arg0: i32, %arg1: i32) -> (i32, i32) {
    %c0_i32 = arith.constant 0 : i32
    %c0_i32_0 = arith.constant 0 : i32
    %c0_i32_1 = arith.constant 0 : i32
    return %c0_i32, %c0_i32_0 : i32, i32
  }
  func.func @transform_3(%arg0: i32, %arg1: i32) -> (i32, i32) {
    %c0_i32 = arith.constant 0 : i32
    %c0_i32_0 = arith.constant 0 : i32
    %c0_i32_1 = arith.constant 0 : i32
    return %c0_i32, %c0_i32_0 : i32, i32
  }
  func.func @transform_4(%arg0: i32, %arg1: i32) -> (i32, i32) {
    %c0_i32 = arith.constant 0 : i32
    %c0_i32_0 = arith.constant 0 : i32
    %c0_i32_1 = arith.constant 0 : i32
    return %c0_i32, %c0_i32_0 : i32, i32
  }
  func.func @transform_5(%arg0: i32, %arg1: i32) -> (i32, i32) {
    %c0_i32 = arith.constant 0 : i32
    %c0_i32_0 = arith.constant 0 : i32
    return %arg0, %c0_i32 : i32, i32
  }
}

module attributes {stable_mosaic.version = 11 : i64} {
  func.func @_two_mlp_head_kernel(%arg0: i32, %arg1: i32, %arg2: memref<16x7xbf16, #tpu.memory_space<vmem>>, %arg3: memref<7x128xbf16, #tpu.memory_space<vmem>>, %arg4: memref<1x128xf32, #tpu.memory_space<vmem>>, %arg5: memref<128x128xbf16, #tpu.memory_space<vmem>>, %arg6: memref<1x128xf32, #tpu.memory_space<vmem>>, %arg7: memref<16x128xf32, #tpu.memory_space<vmem>>, %arg8: memref<16x128xf32, #tpu.memory_space<vmem>>) attributes {dimension_semantics = [#tpu.dimension_semantics<parallel>, #tpu.dimension_semantics<arbitrary>], iteration_bounds = array<i64: 1, 1>, scalar_prefetch = 0 : i64, scratch_operands = 1 : i64, tpu.core_type = #tpu.core_type<tc>, window_params = [{transform_indices = @transform_0, window_bounds = array<i64: 16, 7>}, {transform_indices = @transform_1, window_bounds = array<i64: 7, 128>}, {pipeline_mode = #tpu.pipeline_mode<synchronous>, transform_indices = @transform_2, window_bounds = array<i64: 1, 128>}, {pipeline_mode = #tpu.pipeline_mode<synchronous>, transform_indices = @transform_3, window_bounds = array<i64: 128, 128>}, {pipeline_mode = #tpu.pipeline_mode<synchronous>, transform_indices = @transform_4, window_bounds = array<i64: 1, 128>}, {transform_indices = @transform_5, window_bounds = array<i64: 16, 128>}]} {
    %c0_i32 = arith.constant 0 : i32
    %0 = arith.cmpi eq, %arg1, %c0_i32 : i32
    %1 = arith.extui %0 : i1 to i32
    %c0_i32_0 = arith.constant 0 : i32
    %2 = arith.cmpi ne, %1, %c0_i32_0 : i32
    scf.if %2 {
      %cst_10 = arith.constant 0.000000e+00 : f32
      %12 = vector.broadcast %cst_10 : f32 to vector<16x128xf32>
      %c0_11 = arith.constant 0 : index
      %c0_12 = arith.constant 0 : index
      %13 = vector.load %arg8[%c0_11, %c0_12] : memref<16x128xf32, #tpu.memory_space<vmem>>, vector<16x128xf32>
      tpu.vector_store %arg8[%c0_11, %c0_12], %12 {strides = array<i32>} : memref<16x128xf32, #tpu.memory_space<vmem>>, vector<16x128xf32>,
    } else {
    }
    %c0 = arith.constant 0 : index
    %c0_1 = arith.constant 0 : index
    %3 = vector.load %arg8[%c0, %c0_1] : memref<16x128xf32, #tpu.memory_space<vmem>>, vector<16x128xf32>
    %c0_2 = arith.constant 0 : index
    %c0_3 = arith.constant 0 : index
    %4 = vector.load %arg2[%c0_2, %c0_3] : memref<16x7xbf16, #tpu.memory_space<vmem>>, vector<16x7xbf16>
    %c0_4 = arith.constant 0 : index
    %c0_5 = arith.constant 0 : index
    %5 = vector.load %arg3[%c0_4, %c0_5] : memref<7x128xbf16, #tpu.memory_space<vmem>>, vector<7x128xbf16>
    %cst = arith.constant dense<0.000000e+00> : vector<16x128xf32>
    %6 = tpu.matmul %4, %5, %cst {dimension_numbers = #tpu.dot_dimension_numbers<[1], [0], [0], [1], [0, 0, 1, 1], [], []>} : vector<16x7xbf16>, vector<7x128xbf16>, vector<16x128xf32> -> vector<16x128xf32>
    %7 = arith.addf %3, %6 : vector<16x128xf32>
    %c0_6 = arith.constant 0 : index
    %c0_7 = arith.constant 0 : index
    %8 = vector.load %arg8[%c0_6, %c0_7] : memref<16x128xf32, #tpu.memory_space<vmem>>, vector<16x128xf32>
    tpu.vector_store %arg8[%c0_6, %c0_7], %7 {strides = array<i32>} : memref<16x128xf32, #tpu.memory_space<vmem>>, vector<16x128xf32>,
    %c0_i32_8 = arith.constant 0 : i32
    %9 = arith.cmpi eq, %arg1, %c0_i32_8 : i32
    %10 = arith.extui %9 : i1 to i32
    %c0_i32_9 = arith.constant 0 : i32
    %11 = arith.cmpi ne, %10, %c0_i32_9 : i32
    scf.if %11 {
      %c0_10 = arith.constant 0 : index
      %c0_11 = arith.constant 0 : index
      %12 = vector.load %arg8[%c0_10, %c0_11] : memref<16x128xf32, #tpu.memory_space<vmem>>, vector<16x128xf32>
      %c0_12 = arith.constant 0 : index
      %c0_13 = arith.constant 0 : index
      %13 = vector.load %arg4[%c0_12, %c0_13] : memref<1x128xf32, #tpu.memory_space<vmem>>, vector<1x128xf32>
      %14 = vector.broadcast %13 : vector<1x128xf32> to vector<16x128xf32>
      %15 = arith.addf %12, %14 : vector<16x128xf32>
      %cst_14 = arith.constant 0.000000e+00 : f32
      %16 = vector.broadcast %cst_14 : f32 to vector<16x128xf32>
      %17 = arith.maximumf %15, %16 : vector<16x128xf32>
      %18 = arith.truncf %17 : vector<16x128xf32> to vector<16x128xbf16>
      %c0_15 = arith.constant 0 : index
      %c0_16 = arith.constant 0 : index
      %19 = vector.load %arg5[%c0_15, %c0_16] : memref<128x128xbf16, #tpu.memory_space<vmem>>, vector<128x128xbf16>
      %cst_17 = arith.constant dense<0.000000e+00> : vector<16x128xf32>
      %20 = tpu.matmul %18, %19, %cst_17 {dimension_numbers = #tpu.dot_dimension_numbers<[1], [0], [0], [1], [0, 0, 1, 1], [], []>} : vector<16x128xbf16>, vector<128x128xbf16>, vector<16x128xf32> -> vector<16x128xf32>
      %c0_18 = arith.constant 0 : index
      %c0_19 = arith.constant 0 : index
      %21 = vector.load %arg6[%c0_18, %c0_19] : memref<1x128xf32, #tpu.memory_space<vmem>>, vector<1x128xf32>
      %22 = vector.broadcast %21 : vector<1x128xf32> to vector<16x128xf32>
      %23 = arith.addf %20, %22 : vector<16x128xf32>
      %cst_20 = arith.constant 0.000000e+00 : f32
      %24 = vector.broadcast %cst_20 : f32 to vector<16x128xf32>
      %25 = arith.maximumf %23, %24 : vector<16x128xf32>
      %c0_21 = arith.constant 0 : index
      %c0_22 = arith.constant 0 : index
      %26 = vector.load %arg7[%c0_21, %c0_22] : memref<16x128xf32, #tpu.memory_space<vmem>>, vector<16x128xf32>
      tpu.vector_store %arg7[%c0_21, %c0_22], %25 {strides = array<i32>} : memref<16x128xf32, #tpu.memory_space<vmem>>, vector<16x128xf32>,
    } else {
    }
    return
  }
  func.func @transform_0(%arg0: i32, %arg1: i32) -> (i32, i32) {
    %c0_i32 = arith.constant 0 : i32
    return %arg0, %arg1 : i32, i32
  }
  func.func @transform_1(%arg0: i32, %arg1: i32) -> (i32, i32) {
    %c0_i32 = arith.constant 0 : i32
    %c0_i32_0 = arith.constant 0 : i32
    return %arg1, %c0_i32 : i32, i32
  }
  func.func @transform_2(%arg0: i32, %arg1: i32) -> (i32, i32) {
    %c0_i32 = arith.constant 0 : i32
    %c0_i32_0 = arith.constant 0 : i32
    %c0_i32_1 = arith.constant 0 : i32
    return %c0_i32, %c0_i32_0 : i32, i32
  }
  func.func @transform_3(%arg0: i32, %arg1: i32) -> (i32, i32) {
    %c0_i32 = arith.constant 0 : i32
    %c0_i32_0 = arith.constant 0 : i32
    %c0_i32_1 = arith.constant 0 : i32
    return %c0_i32, %c0_i32_0 : i32, i32
  }
  func.func @transform_4(%arg0: i32, %arg1: i32) -> (i32, i32) {
    %c0_i32 = arith.constant 0 : i32
    %c0_i32_0 = arith.constant 0 : i32
    %c0_i32_1 = arith.constant 0 : i32
    return %c0_i32, %c0_i32_0 : i32, i32
  }
  func.func @transform_5(%arg0: i32, %arg1: i32) -> (i32, i32) {
    %c0_i32 = arith.constant 0 : i32
    %c0_i32_0 = arith.constant 0 : i32
    return %arg0, %c0_i32 : i32, i32
  }
}

</mosaic_0001>

<llo_original>
// kernel: _forward_core.4
$region0: #{_forward_core.4}
  #allocation0 [shape = 'u32[]', space=smem, size = 0x4, offset = 0x4, fixed_abs, tag = 'smem constant byte address 0x4 - core index']
  #allocation1 [shape = 'u32[144,128]{1,0:T(1,128)}', space=vmem, size = 0x12000, scoped, tag = 'internal scratch']
  %s0 = inlined_call_operand.vmem [shape: f32[128,1], index: 0, kind: input, shape index: {}]
  %s1 = inlined_call_operand.vmem [shape: f32[128,1], index: 1, kind: input, shape index: {}]
  %s2 = inlined_call_operand.vmem [shape: f32[128,1], index: 2, kind: input, shape index: {}]
  %s3 = inlined_call_operand.vmem [shape: f32[3,128], index: 3, kind: input, shape index: {}]
  %s4 = inlined_call_operand.vmem [shape: f32[1,128], index: 4, kind: input, shape index: {}]
  %s5 = inlined_call_operand.vmem [shape: f32[128,128], index: 5, kind: output, shape index: {}]
  %s6 = sld [smem:[#allocation0]]
  $region30: #{_forward_core.4} parent=0
    _
  %s8 = ssub.s32 1, %s6
  %s9 = scalar_select 0, %s8, %s6
  // Predicated region
  $region2: #{_forward_core.4} parent=0 // pred_check
    _
  $region3: #{_forward_core.4} parent=0 // pred_check_branch
    %11 = sbr.rel (0) target = $region5
  $region4: #{_forward_core.4} parent=0 // pred_region
    _
  $region5: #{_forward_core.4} parent=0 // pred_fallthru
    _
  // Predicated region
  $region6: #{_forward_core.4} parent=0 // pred_check
    _
  $region7: #{_forward_core.4} parent=0 // pred_check_branch
    %13 = sbr.rel (0) target = $region9
  $region8: #{_forward_core.4} parent=0 // pred_region
    _
  $region9: #{_forward_core.4} parent=0 // pred_fallthru
    _
  // Predicated region
  $region10: #{_forward_core.4} parent=0 // pred_check
    _
  $region11: #{_forward_core.4} parent=0 // pred_check_branch
    %15 = sbr.rel (0) target = $region13
  $region12: #{_forward_core.4} parent=0 // pred_region
    _
  $region13: #{_forward_core.4} parent=0 // pred_fallthru
    _
  // Predicated region
  $region14: #{_forward_core.4} parent=0 // pred_check
    _
  $region15: #{_forward_core.4} parent=0 // pred_check_branch
    %17 = sbr.rel (0) target = $region17
  $region16: #{_forward_core.4} parent=0 // pred_region
    _
  $region17: #{_forward_core.4} parent=0 // pred_fallthru
    _
  // Predicated region
  $region18: #{_forward_core.4} parent=0 // pred_check
    _
  $region19: #{_forward_core.4} parent=0 // pred_check_branch
    %19 = sbr.rel (0) target = $region21
  $region20: #{_forward_core.4} parent=0 // pred_region
    _
  $region21: #{_forward_core.4} parent=0 // pred_fallthru
    _
  %v20 = vld [vmem:[%s3] sm:$0x7]
  %v21 = vld [vmem:[%s4] sm:$0x1]
  %v23 = vlaneseq
  %v24 = vshrl.u32 %v23, 7
  %v25 = vsub.s32 0, %v24
  %v26 = vrot.slane %v21, %v25
  %v28 = vld [vmem:[%s0] sm:$0xff]
  %v29 = vld [vmem:[%s0 + $0x8] sm:$0xff]
  %v30 = vld [vmem:[%s0 + $0x10] sm:$0xff]
  %v31 = vld [vmem:[%s0 + $0x18] sm:$0xff]
  %v32 = vld [vmem:[%s0 + $0x20] sm:$0xff]
  %v33 = vld [vmem:[%s0 + $0x28] sm:$0xff]
  %v34 = vld [vmem:[%s0 + $0x30] sm:$0xff]
  %v35 = vld [vmem:[%s0 + $0x38] sm:$0xff]
  %v36 = vld [vmem:[%s0 + $0x40] sm:$0xff]
  %v37 = vld [vmem:[%s0 + $0x48] sm:$0xff]
  %v38 = vld [vmem:[%s0 + $0x50] sm:$0xff]
  %v39 = vld [vmem:[%s0 + $0x58] sm:$0xff]
  %v40 = vld [vmem:[%s0 + $0x60] sm:$0xff]
  %v41 = vld [vmem:[%s0 + $0x68] sm:$0xff]
  %v42 = vld [vmem:[%s0 + $0x70] sm:$0xff]
  %v43 = vld [vmem:[%s0 + $0x78] sm:$0xff]
  %45 = vset.pattern.permute.xlu0 0
  %46 = vperm.xlu0 %45, %v28
  %v47 = vpop.permute.xlu0 %46
  %50 = vset.pattern.permute.xlu0 0
  %51 = vperm.xlu0 %50, %v29
  %v52 = vpop.permute.xlu0 %51
  %55 = vset.pattern.permute.xlu0 0
  %56 = vperm.xlu0 %55, %v30
  %v57 = vpop.permute.xlu0 %56
  %60 = vset.pattern.permute.xlu0 0
  %61 = vperm.xlu0 %60, %v31
  %v62 = vpop.permute.xlu0 %61
  %65 = vset.pattern.permute.xlu0 0
  %66 = vperm.xlu0 %65, %v32
  %v67 = vpop.permute.xlu0 %66
  %70 = vset.pattern.permute.xlu0 0
  %71 = vperm.xlu0 %70, %v33
  %v72 = vpop.permute.xlu0 %71
  %75 = vset.pattern.permute.xlu0 0
  %76 = vperm.xlu0 %75, %v34
  %v77 = vpop.permute.xlu0 %76
  %80 = vset.pattern.permute.xlu0 0
  %81 = vperm.xlu0 %80, %v35
  %v82 = vpop.permute.xlu0 %81
  %85 = vset.pattern.permute.xlu0 0
  %86 = vperm.xlu0 %85, %v36
  %v87 = vpop.permute.xlu0 %86
  %90 = vset.pattern.permute.xlu0 0
  %91 = vperm.xlu0 %90, %v37
  %v92 = vpop.permute.xlu0 %91
  %95 = vset.pattern.permute.xlu0 0
  %96 = vperm.xlu0 %95, %v38
  %v97 = vpop.permute.xlu0 %96
  %100 = vset.pattern.permute.xlu0 0
  %101 = vperm.xlu0 %100, %v39
  %v102 = vpop.permute.xlu0 %101
  %105 = vset.pattern.permute.xlu0 0
  %106 = vperm.xlu0 %105, %v40
  %v107 = vpop.permute.xlu0 %106
  %110 = vset.pattern.permute.xlu0 0
  %111 = vperm.xlu0 %110, %v41
  %v112 = vpop.permute.xlu0 %111
  %115 = vset.pattern.permute.xlu0 0
  %116 = vperm.xlu0 %115, %v42
  %v117 = vpop.permute.xlu0 %116
  %120 = vset.pattern.permute.xlu0 0
  %121 = vperm.xlu0 %120, %v43
  %v122 = vpop.permute.xlu0 %121
  %v124 = vlaneseq
  %v125 = vshrl.u32 %v124, 7
  %v126 = vsub.s32 0, %v125
  %v127 = vrot.slane %v20, %v126
  %v128 = vmul.f32 %v47, %v127
  %v129 = vmul.f32 %v52, %v127
  %v130 = vmul.f32 %v57, %v127
  %v131 = vmul.f32 %v62, %v127
  %v132 = vmul.f32 %v67, %v127
  %v133 = vmul.f32 %v72, %v127
  %v134 = vmul.f32 %v77, %v127
  %v135 = vmul.f32 %v82, %v127
  %v136 = vmul.f32 %v87, %v127
  %v137 = vmul.f32 %v92, %v127
  %v138 = vmul.f32 %v97, %v127
  %v139 = vmul.f32 %v102, %v127
  %v140 = vmul.f32 %v107, %v127
  %v141 = vmul.f32 %v112, %v127
  %v142 = vmul.f32 %v117, %v127
  %v143 = vmul.f32 %v122, %v127
  %v144 = vadd.f32 %v26, %v128
  %v145 = vadd.f32 %v26, %v129
  %v146 = vadd.f32 %v26, %v130
  %v147 = vadd.f32 %v26, %v131
  %v148 = vadd.f32 %v26, %v132
  %v149 = vadd.f32 %v26, %v133
  %v150 = vadd.f32 %v26, %v134
  %v151 = vadd.f32 %v26, %v135
  %v152 = vadd.f32 %v26, %v136
  %v153 = vadd.f32 %v26, %v137
  %v154 = vadd.f32 %v26, %v138
  %v155 = vadd.f32 %v26, %v139
  %v156 = vadd.f32 %v26, %v140
  %v157 = vadd.f32 %v26, %v141
  %v158 = vadd.f32 %v26, %v142
  %v159 = vadd.f32 %v26, %v143
  %v160 = vld [vmem:[%s1] sm:$0xff]
  %v161 = vld [vmem:[%s1 + $0x8] sm:$0xff]
  %v162 = vld [vmem:[%s1 + $0x10] sm:$0xff]
  %v163 = vld [vmem:[%s1 + $0x18] sm:$0xff]
  %v164 = vld [vmem:[%s1 + $0x20] sm:$0xff]
  %v165 = vld [vmem:[%s1 + $0x28] sm:$0xff]
  %v166 = vld [vmem:[%s1 + $0x30] sm:$0xff]
  %v167 = vld [vmem:[%s1 + $0x38] sm:$0xff]
  %v168 = vld [vmem:[%s1 + $0x40] sm:$0xff]
  %v169 = vld [vmem:[%s1 + $0x48] sm:$0xff]
  %v170 = vld [vmem:[%s1 + $0x50] sm:$0xff]
  %v171 = vld [vmem:[%s1 + $0x58] sm:$0xff]
  %v172 = vld [vmem:[%s1 + $0x60] sm:$0xff]
  %v173 = vld [vmem:[%s1 + $0x68] sm:$0xff]
  %v174 = vld [vmem:[%s1 + $0x70] sm:$0xff]
  %v175 = vld [vmem:[%s1 + $0x78] sm:$0xff]
  %177 = vset.pattern.permute.xlu0 0
  %178 = vperm.xlu0 %177, %v160
  %v179 = vpop.permute.xlu0 %178
  %182 = vset.pattern.permute.xlu0 0
  %183 = vperm.xlu0 %182, %v161
  %v184 = vpop.permute.xlu0 %183
  %187 = vset.pattern.permute.xlu0 0
  %188 = vperm.xlu0 %187, %v162
  %v189 = vpop.permute.xlu0 %188
  %192 = vset.pattern.permute.xlu0 0
  %193 = vperm.xlu0 %192, %v163
  %v194 = vpop.permute.xlu0 %193
  %197 = vset.pattern.permute.xlu0 0
  %198 = vperm.xlu0 %197, %v164
  %v199 = vpop.permute.xlu0 %198
  %202 = vset.pattern.permute.xlu0 0
  %203 = vperm.xlu0 %202, %v165
  %v204 = vpop.permute.xlu0 %203
  %207 = vset.pattern.permute.xlu0 0
  %208 = vperm.xlu0 %207, %v166
  %v209 = vpop.permute.xlu0 %208
  %212 = vset.pattern.permute.xlu0 0
  %213 = vperm.xlu0 %212, %v167
  %v214 = vpop.permute.xlu0 %213
  %217 = vset.pattern.permute.xlu0 0
  %218 = vperm.xlu0 %217, %v168
  %v219 = vpop.permute.xlu0 %218
  %222 = vset.pattern.permute.xlu0 0
  %223 = vperm.xlu0 %222, %v169
  %v224 = vpop.permute.xlu0 %223
  %227 = vset.pattern.permute.xlu0 0
  %228 = vperm.xlu0 %227, %v170
  %v229 = vpop.permute.xlu0 %228
  %232 = vset.pattern.permute.xlu0 0
  %233 = vperm.xlu0 %232, %v171
  %v234 = vpop.permute.xlu0 %233
  %237 = vset.pattern.permute.xlu0 0
  %238 = vperm.xlu0 %237, %v172
  %v239 = vpop.permute.xlu0 %238
  %242 = vset.pattern.permute.xlu0 0
  %243 = vperm.xlu0 %242, %v173
  %v244 = vpop.permute.xlu0 %243
  %247 = vset.pattern.permute.xlu0 0
  %248 = vperm.xlu0 %247, %v174
  %v249 = vpop.permute.xlu0 %248
  %252 = vset.pattern.permute.xlu0 0
  %253 = vperm.xlu0 %252, %v175
  %v254 = vpop.permute.xlu0 %253
  %v256 = vlaneseq
  %v257 = vshrl.u32 %v256, 7
  %v258 = vsub.s32 1, %v257
  %v259 = vrot.slane %v20, %v258
  %v260 = vmul.f32 %v179, %v259
  %v261 = vmul.f32 %v184, %v259
  %v262 = vmul.f32 %v189, %v259
  %v263 = vmul.f32 %v194, %v259
  %v264 = vmul.f32 %v199, %v259
  %v265 = vmul.f32 %v204, %v259
  %v266 = vmul.f32 %v209, %v259
  %v267 = vmul.f32 %v214, %v259
  %v268 = vmul.f32 %v219, %v259
  %v269 = vmul.f32 %v224, %v259
  %v270 = vmul.f32 %v229, %v259
  %v271 = vmul.f32 %v234, %v259
  %v272 = vmul.f32 %v239, %v259
  %v273 = vmul.f32 %v244, %v259
  %v274 = vmul.f32 %v249, %v259
  %v275 = vmul.f32 %v254, %v259
  %v276 = vadd.f32 %v144, %v260
  %v277 = vadd.f32 %v145, %v261
  %v278 = vadd.f32 %v146, %v262
  %v279 = vadd.f32 %v147, %v263
  %v280 = vadd.f32 %v148, %v264
  %v281 = vadd.f32 %v149, %v265
  %v282 = vadd.f32 %v150, %v266
  %v283 = vadd.f32 %v151, %v267
  %v284 = vadd.f32 %v152, %v268
  %v285 = vadd.f32 %v153, %v269
  %v286 = vadd.f32 %v154, %v270
  %v287 = vadd.f32 %v155, %v271
  %v288 = vadd.f32 %v156, %v272
  %v289 = vadd.f32 %v157, %v273
  %v290 = vadd.f32 %v158, %v274
  %v291 = vadd.f32 %v159, %v275
  %v292 = vld [vmem:[%s2] sm:$0xff]
  %v293 = vld [vmem:[%s2 + $0x8] sm:$0xff]
  %v294 = vld [vmem:[%s2 + $0x10] sm:$0xff]
  %v295 = vld [vmem:[%s2 + $0x18] sm:$0xff]
  %v296 = vld [vmem:[%s2 + $0x20] sm:$0xff]
  %v297 = vld [vmem:[%s2 + $0x28] sm:$0xff]
  %v298 = vld [vmem:[%s2 + $0x30] sm:$0xff]
  %v299 = vld [vmem:[%s2 + $0x38] sm:$0xff]
  %v300 = vld [vmem:[%s2 + $0x40] sm:$0xff]
  %v301 = vld [vmem:[%s2 + $0x48] sm:$0xff]
  %v302 = vld [vmem:[%s2 + $0x50] sm:$0xff]
  %v303 = vld [vmem:[%s2 + $0x58] sm:$0xff]
  %v304 = vld [vmem:[%s2 + $0x60] sm:$0xff]
  %v305 = vld [vmem:[%s2 + $0x68] sm:$0xff]
  %v306 = vld [vmem:[%s2 + $0x70] sm:$0xff]
  %v307 = vld [vmem:[%s2 + $0x78] sm:$0xff]
  %309 = vset.pattern.permute.xlu0 0
  %310 = vperm.xlu0 %309, %v292
  %v311 = vpop.permute.xlu0 %310
  %314 = vset.pattern.permute.xlu0 0
  %315 = vperm.xlu0 %314, %v293
  %v316 = vpop.permute.xlu0 %315
  %319 = vset.pattern.permute.xlu0 0
  %320 = vperm.xlu0 %319, %v294
  %v321 = vpop.permute.xlu0 %320
  %324 = vset.pattern.permute.xlu0 0
  %325 = vperm.xlu0 %324, %v295
  %v326 = vpop.permute.xlu0 %325
  %329 = vset.pattern.permute.xlu0 0
  %330 = vperm.xlu0 %329, %v296
  %v331 = vpop.permute.xlu0 %330
  %334 = vset.pattern.permute.xlu0 0
  %335 = vperm.xlu0 %334, %v297
  %v336 = vpop.permute.xlu0 %335
  %339 = vset.pattern.permute.xlu0 0
  %340 = vperm.xlu0 %339, %v298
  %v341 = vpop.permute.xlu0 %340
  %344 = vset.pattern.permute.xlu0 0
  %345 = vperm.xlu0 %344, %v299
  %v346 = vpop.permute.xlu0 %345
  %349 = vset.pattern.permute.xlu0 0
  %350 = vperm.xlu0 %349, %v300
  %v351 = vpop.permute.xlu0 %350
  %354 = vset.pattern.permute.xlu0 0
  %355 = vperm.xlu0 %354, %v301
  %v356 = vpop.permute.xlu0 %355
  %359 = vset.pattern.permute.xlu0 0
  %360 = vperm.xlu0 %359, %v302
  %v361 = vpop.permute.xlu0 %360
  %364 = vset.pattern.permute.xlu0 0
  %365 = vperm.xlu0 %364, %v303
  %v366 = vpop.permute.xlu0 %365
  %369 = vset.pattern.permute.xlu0 0
  %370 = vperm.xlu0 %369, %v304
  %v371 = vpop.permute.xlu0 %370
  %374 = vset.pattern.permute.xlu0 0
  %375 = vperm.xlu0 %374, %v305
  %v376 = vpop.permute.xlu0 %375
  %379 = vset.pattern.permute.xlu0 0
  %380 = vperm.xlu0 %379, %v306
  %v381 = vpop.permute.xlu0 %380
  %384 = vset.pattern.permute.xlu0 0
  %385 = vperm.xlu0 %384, %v307
  %v386 = vpop.permute.xlu0 %385
  %v388 = vlaneseq
  %v389 = vshrl.u32 %v388, 7
  %v390 = vsub.s32 2, %v389
  %v391 = vrot.slane %v20, %v390
  %v392 = vmul.f32 %v311, %v391
  %v393 = vmul.f32 %v316, %v391
  %v394 = vmul.f32 %v321, %v391
  %v395 = vmul.f32 %v326, %v391
  %v396 = vmul.f32 %v331, %v391
  %v397 = vmul.f32 %v336, %v391
  %v398 = vmul.f32 %v341, %v391
  %v399 = vmul.f32 %v346, %v391
  %v400 = vmul.f32 %v351, %v391
  %v401 = vmul.f32 %v356, %v391
  %v402 = vmul.f32 %v361, %v391
  %v403 = vmul.f32 %v366, %v391
  %v404 = vmul.f32 %v371, %v391
  %v405 = vmul.f32 %v376, %v391
  %v406 = vmul.f32 %v381, %v391
  %v407 = vmul.f32 %v386, %v391
  %v408 = vadd.f32 %v276, %v392
  %v409 = vadd.f32 %v277, %v393
  %v410 = vadd.f32 %v278, %v394
  %v411 = vadd.f32 %v279, %v395
  %v412 = vadd.f32 %v280, %v396
  %v413 = vadd.f32 %v281, %v397
  %v414 = vadd.f32 %v282, %v398
  %v415 = vadd.f32 %v283, %v399
  %v416 = vadd.f32 %v284, %v400
  %v417 = vadd.f32 %v285, %v401
  %v418 = vadd.f32 %v286, %v402
  %v419 = vadd.f32 %v287, %v403
  %v420 = vadd.f32 %v288, %v404
  %v421 = vadd.f32 %v289, %v405
  %v422 = vadd.f32 %v290, %v406
  %v423 = vadd.f32 %v291, %v407
  %v424 = vmax.f32 %v408, 0.0
  %v425 = vmax.f32 %v409, 0.0
  %v426 = vmax.f32 %v410, 0.0
  %v427 = vmax.f32 %v411, 0.0
  %v428 = vmax.f32 %v412, 0.0
  %v429 = vmax.f32 %v413, 0.0
  %v430 = vmax.f32 %v414, 0.0
  %v431 = vmax.f32 %v415, 0.0
  %v432 = vmax.f32 %v416, 0.0
  %v433 = vmax.f32 %v417, 0.0
  %v434 = vmax.f32 %v418, 0.0
  %v435 = vmax.f32 %v419, 0.0
  %v436 = vmax.f32 %v420, 0.0
  %v437 = vmax.f32 %v421, 0.0
  %v438 = vmax.f32 %v422, 0.0
  %v439 = vmax.f32 %v423, 0.0
  %440 = vst [vmem:[%s5] sm:$0xff] %v424
  %441 = vst [vmem:[%s5 + $0x8] sm:$0xff] %v425
  %442 = vst [vmem:[%s5 + $0x10] sm:$0xff] %v426
  %443 = vst [vmem:[%s5 + $0x18] sm:$0xff] %v427
  %444 = vst [vmem:[%s5 + $0x20] sm:$0xff] %v428
  %445 = vst [vmem:[%s5 + $0x28] sm:$0xff] %v429
  %446 = vst [vmem:[%s5 + $0x30] sm:$0xff] %v430
  %447 = vst [vmem:[%s5 + $0x38] sm:$0xff] %v431
  %448 = vst [vmem:[%s5 + $0x40] sm:$0xff] %v432
  %449 = vst [vmem:[%s5 + $0x48] sm:$0xff] %v433
  %450 = vst [vmem:[%s5 + $0x50] sm:$0xff] %v434
  %451 = vst [vmem:[%s5 + $0x58] sm:$0xff] %v435
  %452 = vst [vmem:[%s5 + $0x60] sm:$0xff] %v436
  %453 = vst [vmem:[%s5 + $0x68] sm:$0xff] %v437
  %454 = vst [vmem:[%s5 + $0x70] sm:$0xff] %v438
  %455 = vst [vmem:[%s5 + $0x78] sm:$0xff] %v439
  // Predicated region
  $region22: #{_forward_core.4} parent=0 // pred_check
    _
  $region23: #{_forward_core.4} parent=0 // pred_check_branch
    %457 = sbr.rel (0) target = $region25
  $region24: #{_forward_core.4} parent=0 // pred_region
    _
  $region25: #{_forward_core.4} parent=0 // pred_fallthru
    _
  // Predicated region
  $region26: #{_forward_core.4} parent=0 // pred_check
    _
  $region27: #{_forward_core.4} parent=0 // pred_check_branch
    %459 = sbr.rel (0) target = $region29
  $region28: #{_forward_core.4} parent=0 // pred_region
    _
  $region29: #{_forward_core.4} parent=0 // pred_fallthru
    _

// kernel: _forward_core.5
$region0: #{_forward_core.5}
  #allocation0 [shape = 'u32[]', space=smem, size = 0x4, offset = 0x4, fixed_abs, tag = 'smem constant byte address 0x4 - core index']
  #allocation1 [shape = 'u32[144,128]{1,0:T(1,128)}', space=vmem, size = 0x12000, scoped, tag = 'internal scratch']
  #allocation2 [shape = 'f32[16,128]{1,0:T(8,128)}', space=vmem, size = 0x2000, scoped, tag = 'scratch operand']
  %s0 = inlined_call_operand.vmem [shape: bf16[16,2048], index: 0, kind: input, shape index: {}]
  %s1 = inlined_call_operand.vmem [shape: bf16[2048,128], index: 1, kind: input, shape index: {}]
  %s2 = inlined_call_operand.vmem [shape: f32[1,128], index: 2, kind: input, shape index: {}]
  %s3 = inlined_call_operand.vmem [shape: bf16[128,128], index: 3, kind: input, shape index: {}]
  %s4 = inlined_call_operand.vmem [shape: f32[1,128], index: 4, kind: input, shape index: {}]
  %s5 = inlined_call_operand.vmem [shape: f32[16,128], index: 5, kind: output, shape index: {}]
  %s6 = sld [smem:[#allocation0]]
  $region84: #{_forward_core.5} parent=0
    _
  %s8 = ssub.s32 1, %s6
  %s9 = scalar_select 0, %s8, %s6
  $region1: #{_forward_core.5} parent=0
    #allocation3 [shape = 'u8[65536]{0}', space=vmem, size = 0x10000, scoped, tag = 'input window, operand 0']
    loop: start=0, step=1, limit=4
    $region2: #{_forward_core.5} parent=1 // loop_pre_header
      _
    $region3: #{_forward_core.5} parent=1 // loop_header
      %s11 = sphi 0, %s15
      %p12 = scmp.ge.s32.totalorder %s11, 4
      %s18 = sphi 0, %s30
      %s19 = sphi 0, %s26
      %s20 = sphi 0, %s18
      %s21 = sphi 0, %s19
      %s22 = sphi 0, %s20
      %s23 = sphi 0, %s21
      %s35 = sphi 0, %s37
      %s38 = sphi 0, %s35
      %s39 = sphi 0, %s38
      %s55 = sphi 0, %s39
      %s61 = sphi 0, %s63
      %s64 = sphi 0, %s61
      %s65 = sphi 0, %s64
      %s81 = sphi 0, %s65
      %s85 = sphi 0, %s85
      %s87 = sphi 0, %s85
      %s88 = sphi 0, %s87
      %s102 = sphi 0, %s88
      %s106 = sphi 0, %s106
      %s108 = sphi 0, %s106
      %s109 = sphi 0, %s108
      %s123 = sphi 0, %s109
      %s127 = sphi 0, %s127
      %s129 = sphi 0, %s127
      %s130 = sphi 0, %s129
      %s144 = sphi 0, %s130
      %s150 = sphi 0, %s152
      %s153 = sphi 0, %s150
      %s154 = sphi 0, %s153
      %s170 = sphi 0, %s154
    $region4: #{_forward_core.5} parent=1 // loop_header_branch
      %14 = sbr.rel (%p12) target = $region8
    $region5: #{_forward_core.5} parent=1 // loop_body
      %s16 = ssub.s32 %s11, 1
      %s17 = ssub.s32 %s11, 2
      %s24 = sadd.s32 1, %s19
      %p25 = scmp.ge.s32.totalorder %s24, 2
      %s26 = scalar_select %p25, 0, %s24
      %s27 = sadd.s32 1, %s18
      %s28 = scalar_select %p25, %s27, %s18
      %p29 = scmp.ge.s32.totalorder %s28, 1
      %s30 = scalar_select %p29, 0, %s28
      %s31 = ssub.s32 %s18, %s30
      %s32 = ssub.s32 %s19, %s26
      %s33 = sor.u32 %s31, %s32
      %p34 = scmp.eq.s32.totalorder %s33, 0
      %s36 = sadd.s32 %s35, 1
      %s37 = scalar_select %p34, %s35, %s36
      %p40 = pneg %p34
      %p41 = scmp.eq.s32.totalorder %s11, 1
      %p42 = por %p40, %p41
      %p43 = scmp.ne.s32.totalorder %s35, %s38
      %p44 = scmp.eq.s32.totalorder %s11, 0
      %p45 = por %p43, %p44
      %p46 = scmp.ne.s32.totalorder %s35, %s38
      %p47 = scmp.eq.s32.totalorder %s16, 1
      %p48 = por %p46, %p47
      %p49 = scmp.ne.s32.totalorder %s38, %s39
      %p50 = scmp.eq.s32.totalorder %s16, 0
      %p51 = por %p49, %p50
      %p52 = scmp.ne.s32.totalorder %s38, %s39
      %p53 = scmp.eq.s32.totalorder %s17, 1
      %p54 = por %p52, %p53
      %p56 = scmp.ne.s32.totalorder %s39, %s55
      %p57 = scmp.eq.s32.totalorder %s17, 0
      %p58 = por %p56, %p57
      %s59 = ssub.s32 %s19, %s26
      %p60 = scmp.eq.s32.totalorder %s59, 0
      %s62 = sadd.s32 %s61, 1
      %s63 = scalar_select %p60, %s61, %s62
      %p66 = pneg %p60
      %p67 = scmp.eq.s32.totalorder %s11, 1
      %p68 = por %p66, %p67
      %p69 = scmp.ne.s32.totalorder %s61, %s64
      %p70 = scmp.eq.s32.totalorder %s11, 0
      %p71 = por %p69, %p70
      %p72 = scmp.ne.s32.totalorder %s61, %s64
      %p73 = scmp.eq.s32.totalorder %s16, 1
      %p74 = por %p72, %p73
      %p75 = scmp.ne.s32.totalorder %s64, %s65
      %p76 = scmp.eq.s32.totalorder %s16, 0
      %p77 = por %p75, %p76
      %p78 = scmp.ne.s32.totalorder %s64, %s65
      %p79 = scmp.eq.s32.totalorder %s17, 1
      %p80 = por %p78, %p79
      %p82 = scmp.ne.s32.totalorder %s65, %s81
      %p83 = scmp.eq.s32.totalorder %s17, 0
      %p84 = por %p82, %p83
      %s86 = sadd.s32 %s85, 1
      %p89 = scmp.eq.s32.totalorder %s11, 1
      %p90 = scmp.ne.s32.totalorder %s85, %s87
      %p91 = scmp.eq.s32.totalorder %s11, 0
      %p92 = por %p90, %p91
      %p93 = scmp.ne.s32.totalorder %s85, %s87
      %p94 = scmp.eq.s32.totalorder %s16, 1
      %p95 = por %p93, %p94
      %p96 = scmp.ne.s32.totalorder %s87, %s88
      %p97 = scmp.eq.s32.totalorder %s16, 0
      %p98 = por %p96, %p97
      %p99 = scmp.ne.s32.totalorder %s87, %s88
      %p100 = scmp.eq.s32.totalorder %s17, 1
      %p101 = por %p99, %p100
      %p103 = scmp.ne.s32.totalorder %s88, %s102
      %p104 = scmp.eq.s32.totalorder %s17, 0
      %p105 = por %p103, %p104
      %s107 = sadd.s32 %s106, 1
      %p110 = scmp.eq.s32.totalorder %s11, 1
      %p111 = scmp.ne.s32.totalorder %s106, %s108
      %p112 = scmp.eq.s32.totalorder %s11, 0
      %p113 = por %p111, %p112
      %p114 = scmp.ne.s32.totalorder %s106, %s108
      %p115 = scmp.eq.s32.totalorder %s16, 1
      %p116 = por %p114, %p115
      %p117 = scmp.ne.s32.totalorder %s108, %s109
      %p118 = scmp.eq.s32.totalorder %s16, 0
      %p119 = por %p117, %p118
      %p120 = scmp.ne.s32.totalorder %s108, %s109
      %p121 = scmp.eq.s32.totalorder %s17, 1
      %p122 = por %p120, %p121
      %p124 = scmp.ne.s32.totalorder %s109, %s123
      %p125 = scmp.eq.s32.totalorder %s17, 0
      %p126 = por %p124, %p125
      %s128 = sadd.s32 %s127, 1
      %p131 = scmp.eq.s32.totalorder %s11, 1
      %p132 = scmp.ne.s32.totalorder %s127, %s129
      %p133 = scmp.eq.s32.totalorder %s11, 0
      %p134 = por %p132, %p133
      %p135 = scmp.ne.s32.totalorder %s127, %s129
      %p136 = scmp.eq.s32.totalorder %s16, 1
      %p137 = por %p135, %p136
      %p138 = scmp.ne.s32.totalorder %s129, %s130
      %p139 = scmp.eq.s32.totalorder %s16, 0
      %p140 = por %p138, %p139
      %p141 = scmp.ne.s32.totalorder %s129, %s130
      %p142 = scmp.eq.s32.totalorder %s17, 1
      %p143 = por %p141, %p142
      %p145 = scmp.ne.s32.totalorder %s130, %s144
      %p146 = scmp.eq.s32.totalorder %s17, 0
      %p147 = por %p145, %p146
      %s148 = ssub.s32 %s18, %s30
      %p149 = scmp.eq.s32.totalorder %s148, 0
      %s151 = sadd.s32 %s150, 1
      %s152 = scalar_select %p149, %s150, %s151
      %p155 = pneg %p149
      %p156 = scmp.eq.s32.totalorder %s11, 1
      %p157 = por %p155, %p156
      %p158 = scmp.ne.s32.totalorder %s150, %s153
      %p159 = scmp.eq.s32.totalorder %s11, 0
      %p160 = por %p158, %p159
      %p161 = scmp.ne.s32.totalorder %s150, %s153
      %p162 = scmp.eq.s32.totalorder %s16, 1
      %p163 = por %p161, %p162
      %p164 = scmp.ne.s32.totalorder %s153, %s154
      %p165 = scmp.eq.s32.totalorder %s16, 0
      %p166 = por %p164, %p165
      %p167 = scmp.ne.s32.totalorder %s153, %s154
      %p168 = scmp.eq.s32.totalorder %s17, 1
      %p169 = por %p167, %p168
      %p171 = scmp.ne.s32.totalorder %s154, %s170
      %p172 = scmp.eq.s32.totalorder %s17, 0
      %p173 = por %p171, %p172
      %p174 = scmp.le.s32.totalorder 1, %s11
      %p175 = scmp.lt.s32.totalorder %s11, 3
      %p176 = pnand %p174, %p175
      %p177 = pneg %p176
      // Predicated region
      $region9: #{_forward_core.5} parent=5 // pred_check
        _
      $region10: #{_forward_core.5} parent=5 // pred_check_branch
        %179 = sbr.rel (%p176) target = $region12
      $region11: #{_forward_core.5} parent=5 // pred_region
        %s180 = ssub.s32 %s11, 1
        // Predicated region
        $region13: #{_forward_core.5} parent=11 // pred_check
          %p181 = pneg %p98
        $region14: #{_forward_core.5} parent=11 // pred_check_branch
          %183 = sbr.rel (%p181) target = $region16
        $region15: #{_forward_core.5} parent=11 // pred_region
          _
        $region16: #{_forward_core.5} parent=11 // pred_fallthru
          _
        // Predicated region
        $region17: #{_forward_core.5} parent=11 // pred_check
          %p184 = pneg %p119
        $region18: #{_forward_core.5} parent=11 // pred_check_branch
          %186 = sbr.rel (%p184) target = $region20
        $region19: #{_forward_core.5} parent=11 // pred_region
          _
        $region20: #{_forward_core.5} parent=11 // pred_fallthru
          _
        // Predicated region
        $region21: #{_forward_core.5} parent=11 // pred_check
          %p187 = pneg %p140
        $region22: #{_forward_core.5} parent=11 // pred_check_branch
          %189 = sbr.rel (%p187) target = $region24
        $region23: #{_forward_core.5} parent=11 // pred_region
          _
        $region24: #{_forward_core.5} parent=11 // pred_fallthru
          _
      $region12: #{_forward_core.5} parent=5 // pred_fallthru
        _
      %p190 = scmp.lt.s32.totalorder %s11, 2
      // Predicated region
      $region25: #{_forward_core.5} parent=5 // pred_check
        %p191 = pneg %p190
      $region26: #{_forward_core.5} parent=5 // pred_check_branch
        %193 = sbr.rel (%p191) target = $region28
      $region27: #{_forward_core.5} parent=5 // pred_region
        // Predicated region
        $region29: #{_forward_core.5} parent=27 // pred_check
          %p194 = pneg %p45
        $region30: #{_forward_core.5} parent=27 // pred_check_branch
          %196 = sbr.rel (%p194) target = $region32
        $region31: #{_forward_core.5} parent=27 // pred_region
          %s197 = sand.u32 %s35, 1
          %s198 = sand.u32 %s35, 1
          %s199 = smul.addr %s198, 64
          %s200 = scalar_lea.vmem [#allocation3], %s199
          %s201 = smul.u32 2, %s18
          %s202 = smul.u32 8, %s19
          %s203 = smul.addr %s201, 16
          %s204 = sadd.s32 %s202, %s203
          %s205 = smul.addr %s204, 4
          %s206 = scalar_lea.vmem %s0, %s205
          // Predicated region
          $region33: #{_forward_core.5} parent=31 // pred_check
            _
          $region34: #{_forward_core.5} parent=31 // pred_check_branch
            %208 = sbr.rel (0) target = $region36
          $region35: #{_forward_core.5} parent=31 // pred_region
            // Predicated region
            $region37: #{_forward_core.5} parent=35 // pred_check
              _
            $region38: #{_forward_core.5} parent=35 // pred_check_branch
              %210 = sbr.rel (0) target = $region40
            $region39: #{_forward_core.5} parent=35 // pred_region
              loop: start=0, step=1, limit=1
              $region41: #{_forward_core.5} parent=39 // loop_pre_header
                _
              $region42: #{_forward_core.5} parent=39 // loop_header
                %s212 = sphi 0, %s216
                %p213 = scmp.ge.s32.totalorder %s212, 1
                %s217 = sphi %s206, %s206
                %s218 = sphi %s200, %s200
              $region43: #{_forward_core.5} parent=39 // loop_header_branch
                %215 = sbr.rel (%p213) target = $region47
              $region44: #{_forward_core.5} parent=39 // loop_body
                %v219 = vld [vmem:[%s217] sm:$0xff]
                %220 = vst [vmem:[%s218] sm:$0xff] %v219
                %v221 = vld [vmem:[%s217 + $0x8] sm:$0xff]
                %222 = vst [vmem:[%s218 + $0x8] sm:$0xff] %v221
                %v223 = vld [vmem:[%s217 + $0x10] sm:$0xff]
                %224 = vst [vmem:[%s218 + $0x10] sm:$0xff] %v223
                %v225 = vld [vmem:[%s217 + $0x18] sm:$0xff]
                %226 = vst [vmem:[%s218 + $0x18] sm:$0xff] %v225
                %v227 = vld [vmem:[%s217 + $0x40] sm:$0xff]
                %228 = vst [vmem:[%s218 + $0x20] sm:$0xff] %v227
                %v229 = vld [vmem:[%s217 + $0x48] sm:$0xff]
                %230 = vst [vmem:[%s218 + $0x28] sm:$0xff] %v229
                %v231 = vld [vmem:[%s217 + $0x50] sm:$0xff]
                %232 = vst [vmem:[%s218 + $0x30] sm:$0xff] %v231
                %v233 = vld [vmem:[%s217 + $0x58] sm:$0xff]
                %234 = vst [vmem:[%s218 + $0x38] sm:$0xff] %v233
              $region45: #{_forward_core.5} parent=39 // loop_footer
                %s216 = sadd.s32 1, %s212
              $region46: #{_forward_core.5} parent=39 // loop_footer_branch
                %211 = sbr.rel target = $region42
              $region47: #{_forward_core.5} parent=39 // loop_exit
                _
            $region40: #{_forward_core.5} parent=35 // pred_fallthru
              _
            // Predicated region
            $region48: #{_forward_core.5} parent=35 // pred_check
              _
            $region49: #{_forward_core.5} parent=35 // pred_check_branch
              %236 = sbr.rel target = $region51
            $region50: #{_forward_core.5} parent=35 // pred_region
              _
            $region51: #{_forward_core.5} parent=35 // pred_fallthru
              _
          $region36: #{_forward_core.5} parent=31 // pred_fallthru
            _
          %237 = vnop
        $region32: #{_forward_core.5} parent=27 // pred_fallthru
          _
        // Predicated region
        $region52: #{_forward_core.5} parent=27 // pred_check
          %p238 = pneg %p71
        $region53: #{_forward_core.5} parent=27 // pred_check_branch
          %240 = sbr.rel (%p238) target = $region55
        $region54: #{_forward_core.5} parent=27 // pred_region
          %s241 = smul.u32 128, %s19
          %p242 = scmp.lt.s32.totalorder %s241, 255
          %s243 = scalar_select %p242, %s241, 255
          %s244 = smul.addr %s243, 4
          %s245 = scalar_lea.vmem %s1, %s244
          %s246 = smul.u32 128, %s19
        $region55: #{_forward_core.5} parent=27 // pred_fallthru
          _
      $region28: #{_forward_core.5} parent=5 // pred_fallthru
        _
      %p247 = scmp.le.s32.totalorder 1, %s11
      %p248 = scmp.lt.s32.totalorder %s11, 3
      %p249 = pnand %p247, %p248
      %p250 = pneg %p249
      // Predicated region
      $region56: #{_forward_core.5} parent=5 // pred_check
        _
      $region57: #{_forward_core.5} parent=5 // pred_check_branch
        %252 = sbr.rel (%p249) target = $region59
      $region58: #{_forward_core.5} parent=5 // pred_region
        %s253 = ssub.s32 %s11, 1
        %s254 = sand.u32 %s38, 1
        %s255 = sand.u32 %s38, 1
        %s256 = smul.addr %s255, 64
        %s257 = scalar_lea.vmem [#allocation3], %s256
        // Predicated region
        $region60: #{_forward_core.5} parent=58 // pred_check
          %p258 = pneg %p51
        $region61: #{_forward_core.5} parent=58 // pred_check_branch
          %260 = sbr.rel (%p258) target = $region63
        $region62: #{_forward_core.5} parent=58 // pred_region
          _
        $region63: #{_forward_core.5} parent=58 // pred_fallthru
          _
        %s261 = sand.u32 %s38, 1
        %s262 = sand.u32 %s38, 1
        %s263 = smul.addr %s262, 64
        %s264 = scalar_lea.vmem [#allocation3], %s263
        %p265 = pneg %p51
        %p266 = pneg %p48
        %s267 = smul.u32 128, %s21
        %p268 = scmp.lt.s32.totalorder %s267, 255
        %s269 = scalar_select %p268, %s267, 255
        %s270 = smul.addr %s269, 4
        %s271 = scalar_lea.vmem %s1, %s270
        %p272 = pneg %p77
        %p273 = pneg %p74
        %p274 = pneg %p98
        %p275 = pneg %p95
        %p276 = pneg %p119
        %p277 = pneg %p116
        %p278 = pneg %p140
        %p279 = pneg %p137
        %p280 = pneg %p166
        %p281 = pneg %p163
        %s282 = smul.u32 2, %s20
        %p283 = scmp.lt.s32.totalorder %s282, 1
        %s284 = scalar_select %p283, %s282, 1
        %s285 = smul.addr %s284, 8
        %s286 = scalar_lea.vmem %s5, %s285
        %s287 = smul.u32 2, %s20
        %s288 = smul.u32 8, %s21
        %s289 = smul.u32 128, %s21
        %p290 = scmp.lt.s32.totalorder %s289, 255
        %s291 = scalar_select %p290, %s289, 255
        %s292 = smul.addr %s291, 4
        %s293 = scalar_lea.vmem %s1, %s292
        %s294 = smul.u32 128, %s21
        %s295 = smul.u32 2, %s20
        %p296 = scmp.lt.s32.totalorder %s295, 1
        %s297 = scalar_select %p296, %s295, 1
        %s298 = smul.addr %s297, 8
        %s299 = scalar_lea.vmem %s5, %s298
        %s300 = smul.u32 2, %s20
        %p302 = scmp.eq.s32.totalorder %s21, 0
        // Predicated region
        $region64: #{_forward_core.5} parent=58 // pred_check
          %p303 = pneg %p302
        $region65: #{_forward_core.5} parent=58 // pred_check_branch
          %305 = sbr.rel (%p303) target = $region67
        $region66: #{_forward_core.5} parent=58 // pred_region
          %306 = vst [vmem:[#allocation2] sm:$0xff] 0.0
          %307 = vst [vmem:[#allocation2 + $0x8] sm:$0xff] 0.0
        $region67: #{_forward_core.5} parent=58 // pred_fallthru
          _
        %v308 = vld [vmem:[#allocation2] sm:$0xff]
        %v309 = vld [vmem:[#allocation2 + $0x8] sm:$0xff]
        %v310 = vld [vmem:[%s257] sm:$0xff]
        %v311 = vld [vmem:[%s257 + $0x8] sm:$0xff]
        %v312 = vld [vmem:[%s257 + $0x10] sm:$0xff]
        %v313 = vld [vmem:[%s257 + $0x18] sm:$0xff]
        %v314 = vld [vmem:[%s257 + $0x20] sm:$0xff]
        %v315 = vld [vmem:[%s257 + $0x28] sm:$0xff]
        %v316 = vld [vmem:[%s257 + $0x30] sm:$0xff]
        %v317 = vld [vmem:[%s257 + $0x38] sm:$0xff]
        %v318 = vld [vmem:[%s293] sm:$0xf]
        %v319 = vld [vmem:[%s293 + $0x4] sm:$0xf]
        %v320 = vld [vmem:[%s293 + $0x8] sm:$0xf]
        %v321 = vld [vmem:[%s293 + $0xc] sm:$0xf]
        %v322 = vld [vmem:[%s293 + $0x10] sm:$0xf]
        %v323 = vld [vmem:[%s293 + $0x14] sm:$0xf]
        %v324 = vld [vmem:[%s293 + $0x18] sm:$0xf]
        %v325 = vld [vmem:[%s293 + $0x1c] sm:$0xf]
        %v326 = vld [vmem:[%s293 + $0x20] sm:$0xf]
        %v327 = vld [vmem:[%s293 + $0x24] sm:$0xf]
        %v328 = vld [vmem:[%s293 + $0x28] sm:$0xf]
        %v329 = vld [vmem:[%s293 + $0x2c] sm:$0xf]
        %v330 = vld [vmem:[%s293 + $0x30] sm:$0xf]
        %v331 = vld [vmem:[%s293 + $0x34] sm:$0xf]
        %v332 = vld [vmem:[%s293 + $0x38] sm:$0xf]
        %v333 = vld [vmem:[%s293 + $0x3c] sm:$0xf]
        %v334 = vld [vmem:[%s293 + $0x40] sm:$0xf]
        %v335 = vld [vmem:[%s293 + $0x44] sm:$0xf]
        %v336 = vld [vmem:[%s293 + $0x48] sm:$0xf]
        %v337 = vld [vmem:[%s293 + $0x4c] sm:$0xf]
        %v338 = vld [vmem:[%s293 + $0x50] sm:$0xf]
        %v339 = vld [vmem:[%s293 + $0x54] sm:$0xf]
        %v340 = vld [vmem:[%s293 + $0x58] sm:$0xf]
        %v341 = vld [vmem:[%s293 + $0x5c] sm:$0xf]
        %v342 = vld [vmem:[%s293 + $0x60] sm:$0xf]
        %v343 = vld [vmem:[%s293 + $0x64] sm:$0xf]
        %v344 = vld [vmem:[%s293 + $0x68] sm:$0xf]
        %v345 = vld [vmem:[%s293 + $0x6c] sm:$0xf]
        %v346 = vld [vmem:[%s293 + $0x70] sm:$0xf]
        %v347 = vld [vmem:[%s293 + $0x74] sm:$0xf]
        %v348 = vld [vmem:[%s293 + $0x78] sm:$0xf]
        %v349 = vld [vmem:[%s293 + $0x7c] sm:$0xf]
        %v350 = vld [vmem:[%s293 + $0x80] sm:$0xf]
        %v351 = vld [vmem:[%s293 + $0x84] sm:$0xf]
        %v352 = vld [vmem:[%s293 + $0x88] sm:$0xf]
        %v353 = vld [vmem:[%s293 + $0x8c] sm:$0xf]
        %v354 = vld [vmem:[%s293 + $0x90] sm:$0xf]
        %v355 = vld [vmem:[%s293 + $0x94] sm:$0xf]
        %v356 = vld [vmem:[%s293 + $0x98] sm:$0xf]
        %v357 = vld [vmem:[%s293 + $0x9c] sm:$0xf]
        %v358 = vld [vmem:[%s293 + $0xa0] sm:$0xf]
        %v359 = vld [vmem:[%s293 + $0xa4] sm:$0xf]
        %v360 = vld [vmem:[%s293 + $0xa8] sm:$0xf]
        %v361 = vld [vmem:[%s293 + $0xac] sm:$0xf]
        %v362 = vld [vmem:[%s293 + $0xb0] sm:$0xf]
        %v363 = vld [vmem:[%s293 + $0xb4] sm:$0xf]
        %v364 = vld [vmem:[%s293 + $0xb8] sm:$0xf]
        %v365 = vld [vmem:[%s293 + $0xbc] sm:$0xf]
        %v366 = vld [vmem:[%s293 + $0xc0] sm:$0xf]
        %v367 = vld [vmem:[%s293 + $0xc4] sm:$0xf]
        %v368 = vld [vmem:[%s293 + $0xc8] sm:$0xf]
        %v369 = vld [vmem:[%s293 + $0xcc] sm:$0xf]
        %v370 = vld [vmem:[%s293 + $0xd0] sm:$0xf]
        %v371 = vld [vmem:[%s293 + $0xd4] sm:$0xf]
        %v372 = vld [vmem:[%s293 + $0xd8] sm:$0xf]
        %v373 = vld [vmem:[%s293 + $0xdc] sm:$0xf]
        %v374 = vld [vmem:[%s293 + $0xe0] sm:$0xf]
        %v375 = vld [vmem:[%s293 + $0xe4] sm:$0xf]
        %v376 = vld [vmem:[%s293 + $0xe8] sm:$0xf]
        %v377 = vld [vmem:[%s293 + $0xec] sm:$0xf]
        %v378 = vld [vmem:[%s293 + $0xf0] sm:$0xf]
        %v379 = vld [vmem:[%s293 + $0xf4] sm:$0xf]
        %v380 = vld [vmem:[%s293 + $0xf8] sm:$0xf]
        %v381 = vld [vmem:[%s293 + $0xfc] sm:$0xf]
        %v382 = vld [vmem:[%s293 + $0x100] sm:$0xf]
        %v383 = vld [vmem:[%s293 + $0x104] sm:$0xf]
        %v384 = vld [vmem:[%s293 + $0x108] sm:$0xf]
        %v385 = vld [vmem:[%s293 + $0x10c] sm:$0xf]
        %v386 = vld [vmem:[%s293 + $0x110] sm:$0xf]
        %v387 = vld [vmem:[%s293 + $0x114] sm:$0xf]
        %v388 = vld [vmem:[%s293 + $0x118] sm:$0xf]
        %v389 = vld [vmem:[%s293 + $0x11c] sm:$0xf]
        %v390 = vld [vmem:[%s293 + $0x120] sm:$0xf]
        %v391 = vld [vmem:[%s293 + $0x124] sm:$0xf]
        %v392 = vld [vmem:[%s293 + $0x128] sm:$0xf]
        %v393 = vld [vmem:[%s293 + $0x12c] sm:$0xf]
        %v394 = vld [vmem:[%s293 + $0x130] sm:$0xf]
        %v395 = vld [vmem:[%s293 + $0x134] sm:$0xf]
        %v396 = vld [vmem:[%s293 + $0x138] sm:$0xf]
        %v397 = vld [vmem:[%s293 + $0x13c] sm:$0xf]
        %v398 = vld [vmem:[%s293 + $0x140] sm:$0xf]
        %v399 = vld [vmem:[%s293 + $0x144] sm:$0xf]
        %v400 = vld [vmem:[%s293 + $0x148] sm:$0xf]
        %v401 = vld [vmem:[%s293 + $0x14c] sm:$0xf]
        %v402 = vld [vmem:[%s293 + $0x150] sm:$0xf]
        %v403 = vld [vmem:[%s293 + $0x154] sm:$0xf]
        %v404 = vld [vmem:[%s293 + $0x158] sm:$0xf]
        %v405 = vld [vmem:[%s293 + $0x15c] sm:$0xf]
        %v406 = vld [vmem:[%s293 + $0x160] sm:$0xf]
        %v407 = vld [vmem:[%s293 + $0x164] sm:$0xf]
        %v408 = vld [vmem:[%s293 + $0x168] sm:$0xf]
        %v409 = vld [vmem:[%s293 + $0x16c] sm:$0xf]
        %v410 = vld [vmem:[%s293 + $0x170] sm:$0xf]
        %v411 = vld [vmem:[%s293 + $0x174] sm:$0xf]
        %v412 = vld [vmem:[%s293 + $0x178] sm:$0xf]
        %v413 = vld [vmem:[%s293 + $0x17c] sm:$0xf]
        %v414 = vld [vmem:[%s293 + $0x180] sm:$0xf]
        %v415 = vld [vmem:[%s293 + $0x184] sm:$0xf]
        %v416 = vld [vmem:[%s293 + $0x188] sm:$0xf]
        %v417 = vld [vmem:[%s293 + $0x18c] sm:$0xf]
        %v418 = vld [vmem:[%s293 + $0x190] sm:$0xf]
        %v419 = vld [vmem:[%s293 + $0x194] sm:$0xf]
        %v420 = vld [vmem:[%s293 + $0x198] sm:$0xf]
        %v421 = vld [vmem:[%s293 + $0x19c] sm:$0xf]
        %v422 = vld [vmem:[%s293 + $0x1a0] sm:$0xf]
        %v423 = vld [vmem:[%s293 + $0x1a4] sm:$0xf]
        %v424 = vld [vmem:[%s293 + $0x1a8] sm:$0xf]
        %v425 = vld [vmem:[%s293 + $0x1ac] sm:$0xf]
        %v426 = vld [vmem:[%s293 + $0x1b0] sm:$0xf]
        %v427 = vld [vmem:[%s293 + $0x1b4] sm:$0xf]
        %v428 = vld [vmem:[%s293 + $0x1b8] sm:$0xf]
        %v429 = vld [vmem:[%s293 + $0x1bc] sm:$0xf]
        %v430 = vld [vmem:[%s293 + $0x1c0] sm:$0xf]
        %v431 = vld [vmem:[%s293 + $0x1c4] sm:$0xf]
        %v432 = vld [vmem:[%s293 + $0x1c8] sm:$0xf]
        %v433 = vld [vmem:[%s293 + $0x1cc] sm:$0xf]
        %v434 = vld [vmem:[%s293 + $0x1d0] sm:$0xf]
        %v435 = vld [vmem:[%s293 + $0x1d4] sm:$0xf]
        %v436 = vld [vmem:[%s293 + $0x1d8] sm:$0xf]
        %v437 = vld [vmem:[%s293 + $0x1dc] sm:$0xf]
        %v438 = vld [vmem:[%s293 + $0x1e0] sm:$0xf]
        %v439 = vld [vmem:[%s293 + $0x1e4] sm:$0xf]
        %v440 = vld [vmem:[%s293 + $0x1e8] sm:$0xf]
        %v441 = vld [vmem:[%s293 + $0x1ec] sm:$0xf]
        %v442 = vld [vmem:[%s293 + $0x1f0] sm:$0xf]
        %v443 = vld [vmem:[%s293 + $0x1f4] sm:$0xf]
        %v444 = vld [vmem:[%s293 + $0x1f8] sm:$0xf]
        %v445 = vld [vmem:[%s293 + $0x1fc] sm:$0xf]
        %v454 = vunpack.c.l.b16 %v310
        %v455 = vunpack.c.h.b16 %v310
        %v456 = vunpack.c.l.b16 %v311
        %v457 = vunpack.c.h.b16 %v311
        %v458 = vunpack.c.l.b16 %v312
        %v459 = vunpack.c.h.b16 %v312
        %v460 = vunpack.c.l.b16 %v313
        %v461 = vunpack.c.h.b16 %v313
        %v462 = vunpack.c.l.b16 %v314
        %v463 = vunpack.c.h.b16 %v314
        %v464 = vunpack.c.l.b16 %v315
        %v465 = vunpack.c.h.b16 %v315
        %v466 = vunpack.c.l.b16 %v316
        %v467 = vunpack.c.h.b16 %v316
        %v468 = vunpack.c.l.b16 %v317
        %v469 = vunpack.c.h.b16 %v317
        %v470 = vpack.c.b16 %v462, %v454
        %v471 = vpack.c.b16 %v463, %v455
        %v472 = vpack.c.b16 %v464, %v456
        %v473 = vpack.c.b16 %v465, %v457
        %v474 = vpack.c.b16 %v466, %v458
        %v475 = vpack.c.b16 %v467, %v459
        %v476 = vpack.c.b16 %v468, %v460
        %v477 = vpack.c.b16 %v469, %v461
        %v614 = vunpack.c.l.b16 %v318
        %v615 = vunpack.c.l.b16 %v319
        %v616 = vunpack.c.l.b16 %v320
        %v617 = vunpack.c.l.b16 %v321
        %v618 = vunpack.c.l.b16 %v322
        %v619 = vunpack.c.l.b16 %v323
        %v620 = vunpack.c.l.b16 %v324
        %v621 = vunpack.c.l.b16 %v325
        %v622 = vunpack.c.l.b16 %v326
        %v623 = vunpack.c.l.b16 %v327
        %v624 = vunpack.c.l.b16 %v328
        %v625 = vunpack.c.l.b16 %v329
        %v626 = vunpack.c.l.b16 %v330
        %v627 = vunpack.c.l.b16 %v331
        %v628 = vunpack.c.l.b16 %v332
        %v629 = vunpack.c.l.b16 %v333
        %v630 = vunpack.c.l.b16 %v334
        %v631 = vunpack.c.l.b16 %v335
        %v632 = vunpack.c.l.b16 %v336
        %v633 = vunpack.c.l.b16 %v337
        %v634 = vunpack.c.l.b16 %v338
        %v635 = vunpack.c.l.b16 %v339
        %v636 = vunpack.c.l.b16 %v340
        %v637 = vunpack.c.l.b16 %v341
        %v638 = vunpack.c.l.b16 %v342
        %v639 = vunpack.c.l.b16 %v343
        %v640 = vunpack.c.l.b16 %v344
        %v641 = vunpack.c.l.b16 %v345
        %v642 = vunpack.c.l.b16 %v346
        %v643 = vunpack.c.l.b16 %v347
        %v644 = vunpack.c.l.b16 %v348
        %v645 = vunpack.c.l.b16 %v349
        %v646 = vunpack.c.l.b16 %v350
        %v647 = vunpack.c.l.b16 %v351
        %v648 = vunpack.c.l.b16 %v352
        %v649 = vunpack.c.l.b16 %v353
        %v650 = vunpack.c.l.b16 %v354
        %v651 = vunpack.c.l.b16 %v355
        %v652 = vunpack.c.l.b16 %v356
        %v653 = vunpack.c.l.b16 %v357
        %v654 = vunpack.c.l.b16 %v358
        %v655 = vunpack.c.l.b16 %v359
        %v656 = vunpack.c.l.b16 %v360
        %v657 = vunpack.c.l.b16 %v361
        %v658 = vunpack.c.l.b16 %v362
        %v659 = vunpack.c.l.b16 %v363
        %v660 = vunpack.c.l.b16 %v364
        %v661 = vunpack.c.l.b16 %v365
        %v662 = vunpack.c.l.b16 %v366
        %v663 = vunpack.c.l.b16 %v367
        %v664 = vunpack.c.l.b16 %v368
        %v665 = vunpack.c.l.b16 %v369
        %v666 = vunpack.c.l.b16 %v370
        %v667 = vunpack.c.l.b16 %v371
        %v668 = vunpack.c.l.b16 %v372
        %v669 = vunpack.c.l.b16 %v373
        %v670 = vunpack.c.l.b16 %v374
        %v671 = vunpack.c.l.b16 %v375
        %v672 = vunpack.c.l.b16 %v376
        %v673 = vunpack.c.l.b16 %v377
        %v674 = vunpack.c.l.b16 %v378
        %v675 = vunpack.c.l.b16 %v379
        %v676 = vunpack.c.l.b16 %v380
        %v677 = vunpack.c.l.b16 %v381
        %v678 = vunpack.c.l.b16 %v382
        %v679 = vunpack.c.l.b16 %v383
        %v680 = vunpack.c.l.b16 %v384
        %v681 = vunpack.c.l.b16 %v385
        %v682 = vunpack.c.l.b16 %v386
        %v683 = vunpack.c.l.b16 %v387
        %v684 = vunpack.c.l.b16 %v388
        %v685 = vunpack.c.l.b16 %v389
        %v686 = vunpack.c.l.b16 %v390
        %v687 = vunpack.c.l.b16 %v391
        %v688 = vunpack.c.l.b16 %v392
        %v689 = vunpack.c.l.b16 %v393
        %v690 = vunpack.c.l.b16 %v394
        %v691 = vunpack.c.l.b16 %v395
        %v692 = vunpack.c.l.b16 %v396
        %v693 = vunpack.c.l.b16 %v397
        %v694 = vunpack.c.l.b16 %v398
        %v695 = vunpack.c.l.b16 %v399
        %v696 = vunpack.c.l.b16 %v400
        %v697 = vunpack.c.l.b16 %v401
        %v698 = vunpack.c.l.b16 %v402
        %v699 = vunpack.c.l.b16 %v403
        %v700 = vunpack.c.l.b16 %v404
        %v701 = vunpack.c.l.b16 %v405
        %v702 = vunpack.c.l.b16 %v406
        %v703 = vunpack.c.l.b16 %v407
        %v704 = vunpack.c.l.b16 %v408
        %v705 = vunpack.c.l.b16 %v409
        %v706 = vunpack.c.l.b16 %v410
        %v707 = vunpack.c.l.b16 %v411
        %v708 = vunpack.c.l.b16 %v412
        %v709 = vunpack.c.l.b16 %v413
        %v710 = vunpack.c.l.b16 %v414
        %v711 = vunpack.c.l.b16 %v415
        %v712 = vunpack.c.l.b16 %v416
        %v713 = vunpack.c.l.b16 %v417
        %v714 = vunpack.c.l.b16 %v418
        %v715 = vunpack.c.l.b16 %v419
        %v716 = vunpack.c.l.b16 %v420
        %v717 = vunpack.c.l.b16 %v421
        %v718 = vunpack.c.l.b16 %v422
        %v719 = vunpack.c.l.b16 %v423
        %v720 = vunpack.c.l.b16 %v424
        %v721 = vunpack.c.l.b16 %v425
        %v722 = vunpack.c.l.b16 %v426
        %v723 = vunpack.c.l.b16 %v427
        %v724 = vunpack.c.l.b16 %v428
        %v725 = vunpack.c.l.b16 %v429
        %v726 = vunpack.c.l.b16 %v430
        %v727 = vunpack.c.l.b16 %v431
        %v728 = vunpack.c.l.b16 %v432
        %v729 = vunpack.c.l.b16 %v433
        %v730 = vunpack.c.l.b16 %v434
        %v731 = vunpack.c.l.b16 %v435
        %v732 = vunpack.c.l.b16 %v436
        %v733 = vunpack.c.l.b16 %v437
        %v734 = vunpack.c.l.b16 %v438
        %v735 = vunpack.c.l.b16 %v439
        %v736 = vunpack.c.l.b16 %v440
        %v737 = vunpack.c.l.b16 %v441
        %v738 = vunpack.c.l.b16 %v442
        %v739 = vunpack.c.l.b16 %v443
        %v740 = vunpack.c.l.b16 %v444
        %v741 = vunpack.c.l.b16 %v445
        %v742 = vpack.c.b16 %v615, %v614
        %v743 = vpack.c.b16 %v617, %v616
        %v744 = vpack.c.b16 %v619, %v618
        %v745 = vpack.c.b16 %v621, %v620
        %v746 = vpack.c.b16 %v623, %v622
        %v747 = vpack.c.b16 %v625, %v624
        %v748 = vpack.c.b16 %v627, %v626
        %v749 = vpack.c.b16 %v629, %v628
        %v750 = vpack.c.b16 %v631, %v630
        %v751 = vpack.c.b16 %v633, %v632
        %v752 = vpack.c.b16 %v635, %v634
        %v753 = vpack.c.b16 %v637, %v636
        %v754 = vpack.c.b16 %v639, %v638
        %v755 = vpack.c.b16 %v641, %v640
        %v756 = vpack.c.b16 %v643, %v642
        %v757 = vpack.c.b16 %v645, %v644
        %v758 = vpack.c.b16 %v647, %v646
        %v759 = vpack.c.b16 %v649, %v648
        %v760 = vpack.c.b16 %v651, %v650
        %v761 = vpack.c.b16 %v653, %v652
        %v762 = vpack.c.b16 %v655, %v654
        %v763 = vpack.c.b16 %v657, %v656
        %v764 = vpack.c.b16 %v659, %v658
        %v765 = vpack.c.b16 %v661, %v660
        %v766 = vpack.c.b16 %v663, %v662
        %v767 = vpack.c.b16 %v665, %v664
        %v768 = vpack.c.b16 %v667, %v666
        %v769 = vpack.c.b16 %v669, %v668
        %v770 = vpack.c.b16 %v671, %v670
        %v771 = vpack.c.b16 %v673, %v672
        %v772 = vpack.c.b16 %v675, %v674
        %v773 = vpack.c.b16 %v677, %v676
        %v774 = vpack.c.b16 %v679, %v678
        %v775 = vpack.c.b16 %v681, %v680
        %v776 = vpack.c.b16 %v683, %v682
        %v777 = vpack.c.b16 %v685, %v684
        %v778 = vpack.c.b16 %v687, %v686
        %v779 = vpack.c.b16 %v689, %v688
        %v780 = vpack.c.b16 %v691, %v690
        %v781 = vpack.c.b16 %v693, %v692
        %v782 = vpack.c.b16 %v695, %v694
        %v783 = vpack.c.b16 %v697, %v696
        %v784 = vpack.c.b16 %v699, %v698
        %v785 = vpack.c.b16 %v701, %v700
        %v786 = vpack.c.b16 %v703, %v702
        %v787 = vpack.c.b16 %v705, %v704
        %v788 = vpack.c.b16 %v707, %v706
        %v789 = vpack.c.b16 %v709, %v708
        %v790 = vpack.c.b16 %v711, %v710
        %v791 = vpack.c.b16 %v713, %v712
        %v792 = vpack.c.b16 %v715, %v714
        %v793 = vpack.c.b16 %v717, %v716
        %v794 = vpack.c.b16 %v719, %v718
        %v795 = vpack.c.b16 %v721, %v720
        %v796 = vpack.c.b16 %v723, %v722
        %v797 = vpack.c.b16 %v725, %v724
        %v798 = vpack.c.b16 %v727, %v726
        %v799 = vpack.c.b16 %v729, %v728
        %v800 = vpack.c.b16 %v731, %v730
        %v801 = vpack.c.b16 %v733, %v732
        %v802 = vpack.c.b16 %v735, %v734
        %v803 = vpack.c.b16 %v737, %v736
        %v804 = vpack.c.b16 %v739, %v738
        %v805 = vpack.c.b16 %v741, %v740
        %870 = vmatprep.subr.bf16.mxu0 0
        %871 = vmatpush1.bf16.msra.mxu0 %v749
        %872 = vmatprep.subr.bf16.mxu0 0
        %873 = vmatpush1.bf16.msra.mxu0 %v748
        %874 = vmatprep.subr.bf16.mxu0 0
        %875 = vmatpush1.bf16.msra.mxu0 %v747
        %876 = vmatprep.subr.bf16.mxu0 0
        %877 = vmatpush1.bf16.msra.mxu0 %v746
        %878 = vmatprep.subr.bf16.mxu0 0
        %879 = vmatpush1.bf16.msra.mxu0 %v745
        %880 = vmatprep.subr.bf16.mxu0 0
        %881 = vmatpush1.bf16.msra.mxu0 %v744
        %882 = vmatprep.subr.bf16.mxu0 0
        %883 = vmatpush1.bf16.msra.mxu0 %v743
        %884 = vmatprep.subr.bf16.mxu0 0
        %885 = vmatpush1.bf16.msra.mxu0 %v742
        %886 = vmatprep.subr.bf16.mxu0 0
        %887 = vmatpush2.bf16.msra.mxu0 %v757
        %888 = vmatprep.subr.bf16.mxu0 0
        %889 = vmatpush2.bf16.msra.mxu0 %v756
        %890 = vmatprep.subr.bf16.mxu0 0
        %891 = vmatpush2.bf16.msra.mxu0 %v755
        %892 = vmatprep.subr.bf16.mxu0 0
        %893 = vmatpush2.bf16.msra.mxu0 %v754
        %894 = vmatprep.subr.bf16.mxu0 0
        %895 = vmatpush2.bf16.msra.mxu0 %v753
        %896 = vmatprep.subr.bf16.mxu0 0
        %897 = vmatpush2.bf16.msra.mxu0 %v752
        %898 = vmatprep.subr.bf16.mxu0 0
        %899 = vmatpush2.bf16.msra.mxu0 %v751
        %900 = vmatprep.subr.bf16.mxu0 0
        %901 = vmatpush2.bf16.msra.mxu0 %v750
        %902 = vmatprep.mubr.bf16.mxu0 %v471
        %903 = vmatmul.mubr.bf16.gmra.mxu0 %v470
        %v904 = vpop.f32.mrf.mxu0
        %v905 = vadd.f32 0.0, %v904
        %v906 = vpop.f32.mrf.mxu0
        %v907 = vpop.f32.mrf.mxu0
        %v908 = vadd.f32 0.0, %v907
        %v909 = vpop.f32.mrf.mxu0
        %910 = vdwg.mxu0
        %911 = vmatprep.subr.bf16.mxu0 0
        %912 = vmatpush1.bf16.msra.mxu0 %v765
        %913 = vmatprep.subr.bf16.mxu0 0
        %914 = vmatpush1.bf16.msra.mxu0 %v764
        %915 = vmatprep.subr.bf16.mxu0 0
        %916 = vmatpush1.bf16.msra.mxu0 %v763
        %917 = vmatprep.subr.bf16.mxu0 0
        %918 = vmatpush1.bf16.msra.mxu0 %v762
        %919 = vmatprep.subr.bf16.mxu0 0
        %920 = vmatpush1.bf16.msra.mxu0 %v761
        %921 = vmatprep.subr.bf16.mxu0 0
        %922 = vmatpush1.bf16.msra.mxu0 %v760
        %923 = vmatprep.subr.bf16.mxu0 0
        %924 = vmatpush1.bf16.msra.mxu0 %v759
        %925 = vmatprep.subr.bf16.mxu0 0
        %926 = vmatpush1.bf16.msra.mxu0 %v758
        %927 = vmatprep.subr.bf16.mxu0 0
        %928 = vmatpush2.bf16.msra.mxu0 %v773
        %929 = vmatprep.subr.bf16.mxu0 0
        %930 = vmatpush2.bf16.msra.mxu0 %v772
        %931 = vmatprep.subr.bf16.mxu0 0
        %932 = vmatpush2.bf16.msra.mxu0 %v771
        %933 = vmatprep.subr.bf16.mxu0 0
        %934 = vmatpush2.bf16.msra.mxu0 %v770
        %935 = vmatprep.subr.bf16.mxu0 0
        %936 = vmatpush2.bf16.msra.mxu0 %v769
        %937 = vmatprep.subr.bf16.mxu0 0
        %938 = vmatpush2.bf16.msra.mxu0 %v768
        %939 = vmatprep.subr.bf16.mxu0 0
        %940 = vmatpush2.bf16.msra.mxu0 %v767
        %941 = vmatprep.subr.bf16.mxu0 0
        %942 = vmatpush2.bf16.msra.mxu0 %v766
        %943 = vmatprep.mubr.bf16.mxu0 %v473
        %944 = vmatmul.mubr.bf16.gmra.mxu0 %v472
        %v945 = vpop.f32.mrf.mxu0
        %v946 = vadd.f32 %v905, %v945
        %v947 = vpop.f32.mrf.mxu0
        %v948 = vpop.f32.mrf.mxu0
        %v949 = vadd.f32 %v908, %v948
        %v950 = vpop.f32.mrf.mxu0
        %951 = vdwg.mxu0
        %952 = vmatprep.subr.bf16.mxu0 0
        %953 = vmatpush1.bf16.msra.mxu0 %v781
        %954 = vmatprep.subr.bf16.mxu0 0
        %955 = vmatpush1.bf16.msra.mxu0 %v780
        %956 = vmatprep.subr.bf16.mxu0 0
        %957 = vmatpush1.bf16.msra.mxu0 %v779
        %958 = vmatprep.subr.bf16.mxu0 0
        %959 = vmatpush1.bf16.msra.mxu0 %v778
        %960 = vmatprep.subr.bf16.mxu0 0
        %961 = vmatpush1.bf16.msra.mxu0 %v777
        %962 = vmatprep.subr.bf16.mxu0 0
        %963 = vmatpush1.bf16.msra.mxu0 %v776
        %964 = vmatprep.subr.bf16.mxu0 0
        %965 = vmatpush1.bf16.msra.mxu0 %v775
        %966 = vmatprep.subr.bf16.mxu0 0
        %967 = vmatpush1.bf16.msra.mxu0 %v774
        %968 = vmatprep.subr.bf16.mxu0 0
        %969 = vmatpush2.bf16.msra.mxu0 %v789
        %970 = vmatprep.subr.bf16.mxu0 0
        %971 = vmatpush2.bf16.msra.mxu0 %v788
        %972 = vmatprep.subr.bf16.mxu0 0
        %973 = vmatpush2.bf16.msra.mxu0 %v787
        %974 = vmatprep.subr.bf16.mxu0 0
        %975 = vmatpush2.bf16.msra.mxu0 %v786
        %976 = vmatprep.subr.bf16.mxu0 0
        %977 = vmatpush2.bf16.msra.mxu0 %v785
        %978 = vmatprep.subr.bf16.mxu0 0
        %979 = vmatpush2.bf16.msra.mxu0 %v784
        %980 = vmatprep.subr.bf16.mxu0 0
        %981 = vmatpush2.bf16.msra.mxu0 %v783
        %982 = vmatprep.subr.bf16.mxu0 0
        %983 = vmatpush2.bf16.msra.mxu0 %v782
        %984 = vmatprep.mubr.bf16.mxu0 %v475
        %985 = vmatmul.mubr.bf16.gmra.mxu0 %v474
        %v986 = vpop.f32.mrf.mxu0
        %v987 = vadd.f32 %v946, %v986
        %v988 = vpop.f32.mrf.mxu0
        %v989 = vpop.f32.mrf.mxu0
        %v990 = vadd.f32 %v949, %v989
        %v991 = vpop.f32.mrf.mxu0
        %992 = vdwg.mxu0
        %993 = vmatprep.subr.bf16.mxu0 0
        %994 = vmatpush1.bf16.msra.mxu0 %v797
        %995 = vmatprep.subr.bf16.mxu0 0
        %996 = vmatpush1.bf16.msra.mxu0 %v796
        %997 = vmatprep.subr.bf16.mxu0 0
        %998 = vmatpush1.bf16.msra.mxu0 %v795
        %999 = vmatprep.subr.bf16.mxu0 0
        %1000 = vmatpush1.bf16.msra.mxu0 %v794
        %1001 = vmatprep.subr.bf16.mxu0 0
        %1002 = vmatpush1.bf16.msra.mxu0 %v793
        %1003 = vmatprep.subr.bf16.mxu0 0
        %1004 = vmatpush1.bf16.msra.mxu0 %v792
        %1005 = vmatprep.subr.bf16.mxu0 0
        %1006 = vmatpush1.bf16.msra.mxu0 %v791
        %1007 = vmatprep.subr.bf16.mxu0 0
        %1008 = vmatpush1.bf16.msra.mxu0 %v790
        %1009 = vmatprep.subr.bf16.mxu0 0
        %1010 = vmatpush2.bf16.msra.mxu0 %v805
        %1011 = vmatprep.subr.bf16.mxu0 0
        %1012 = vmatpush2.bf16.msra.mxu0 %v804
        %1013 = vmatprep.subr.bf16.mxu0 0
        %1014 = vmatpush2.bf16.msra.mxu0 %v803
        %1015 = vmatprep.subr.bf16.mxu0 0
        %1016 = vmatpush2.bf16.msra.mxu0 %v802
        %1017 = vmatprep.subr.bf16.mxu0 0
        %1018 = vmatpush2.bf16.msra.mxu0 %v801
        %1019 = vmatprep.subr.bf16.mxu0 0
        %1020 = vmatpush2.bf16.msra.mxu0 %v800
        %1021 = vmatprep.subr.bf16.mxu0 0
        %1022 = vmatpush2.bf16.msra.mxu0 %v799
        %1023 = vmatprep.subr.bf16.mxu0 0
        %1024 = vmatpush2.bf16.msra.mxu0 %v798
        %1025 = vmatprep.mubr.bf16.mxu0 %v477
        %1026 = vmatmul.mubr.bf16.gmra.mxu0 %v476
        %v1027 = vpop.f32.mrf.mxu0
        %v1028 = vadd.f32 %v987, %v1027
        %v1029 = vpop.f32.mrf.mxu0
        %v1030 = vpop.f32.mrf.mxu0
        %v1031 = vadd.f32 %v990, %v1030
        %v1032 = vpop.f32.mrf.mxu0
        %1033 = vdwg.mxu0
        %v1034 = vadd.f32 %v308, %v1028
        %v1035 = vadd.f32 %v309, %v1031
        %1036 = vst [vmem:[#allocation2] sm:$0xff] %v1034
        %1037 = vst [vmem:[#allocation2 + $0x8] sm:$0xff] %v1035
        %p1038 = scmp.eq.s32.totalorder %s21, 1
        // Predicated region
        $region68: #{_forward_core.5} parent=58 // pred_check
          %p1039 = pneg %p1038
        $region69: #{_forward_core.5} parent=58 // pred_check_branch
          %1041 = sbr.rel (%p1039) target = $region71
        $region70: #{_forward_core.5} parent=58 // pred_region
          %v1042 = vld [vmem:[#allocation2] sm:$0xff]
          %v1043 = vld [vmem:[#allocation2 + $0x8] sm:$0xff]
          %v1044 = vld [vmem:[%s2] sm:$0x1]
          %v1046 = vlaneseq
          %v1047 = vshrl.u32 %v1046, 7
          %v1048 = vsub.s32 0, %v1047
          %v1049 = vrot.slane %v1044, %v1048
          %v1051 = vadd.f32 %v1042, %v1049
          %v1052 = vadd.f32 %v1043, %v1049
          %v1053 = vmax.f32 %v1051, 0.0
          %v1054 = vmax.f32 %v1052, 0.0
          %v1055 = vpack.c.bf16 %v1054, %v1053
          %v1056 = vld [vmem:[%s3] sm:$0xf]
          %v1057 = vld [vmem:[%s3 + $0x4] sm:$0xf]
          %v1058 = vld [vmem:[%s3 + $0x8] sm:$0xf]
          %v1059 = vld [vmem:[%s3 + $0xc] sm:$0xf]
          %v1060 = vld [vmem:[%s3 + $0x10] sm:$0xf]
          %v1061 = vld [vmem:[%s3 + $0x14] sm:$0xf]
          %v1062 = vld [vmem:[%s3 + $0x18] sm:$0xf]
          %v1063 = vld [vmem:[%s3 + $0x1c] sm:$0xf]
          %v1064 = vld [vmem:[%s3 + $0x20] sm:$0xf]
          %v1065 = vld [vmem:[%s3 + $0x24] sm:$0xf]
          %v1066 = vld [vmem:[%s3 + $0x28] sm:$0xf]
          %v1067 = vld [vmem:[%s3 + $0x2c] sm:$0xf]
          %v1068 = vld [vmem:[%s3 + $0x30] sm:$0xf]
          %v1069 = vld [vmem:[%s3 + $0x34] sm:$0xf]
          %v1070 = vld [vmem:[%s3 + $0x38] sm:$0xf]
          %v1071 = vld [vmem:[%s3 + $0x3c] sm:$0xf]
          %v1072 = vld [vmem:[%s4] sm:$0x1]
          %v1074 = vlaneseq
          %v1075 = vshrl.u32 %v1074, 7
          %v1076 = vsub.s32 0, %v1075
          %v1077 = vrot.slane %v1072, %v1076
          %v1095 = vunpack.c.l.b16 %v1056
          %v1096 = vunpack.c.l.b16 %v1057
          %v1097 = vunpack.c.l.b16 %v1058
          %v1098 = vunpack.c.l.b16 %v1059
          %v1099 = vunpack.c.l.b16 %v1060
          %v1100 = vunpack.c.l.b16 %v1061
          %v1101 = vunpack.c.l.b16 %v1062
          %v1102 = vunpack.c.l.b16 %v1063
          %v1103 = vunpack.c.l.b16 %v1064
          %v1104 = vunpack.c.l.b16 %v1065
          %v1105 = vunpack.c.l.b16 %v1066
          %v1106 = vunpack.c.l.b16 %v1067
          %v1107 = vunpack.c.l.b16 %v1068
          %v1108 = vunpack.c.l.b16 %v1069
          %v1109 = vunpack.c.l.b16 %v1070
          %v1110 = vunpack.c.l.b16 %v1071
          %v1111 = vpack.c.b16 %v1096, %v1095
          %v1112 = vpack.c.b16 %v1098, %v1097
          %v1113 = vpack.c.b16 %v1100, %v1099
          %v1114 = vpack.c.b16 %v1102, %v1101
          %v1115 = vpack.c.b16 %v1104, %v1103
          %v1116 = vpack.c.b16 %v1106, %v1105
          %v1117 = vpack.c.b16 %v1108, %v1107
          %v1118 = vpack.c.b16 %v1110, %v1109
          %1127 = vmatprep.subr.bf16.mxu0 0
          %1128 = vmatpush1.bf16.msra.mxu0 %v1118
          %1129 = vmatprep.subr.bf16.mxu0 0
          %1130 = vmatpush1.bf16.msra.mxu0 %v1117
          %1131 = vmatprep.subr.bf16.mxu0 0
          %1132 = vmatpush1.bf16.msra.mxu0 %v1116
          %1133 = vmatprep.subr.bf16.mxu0 0
          %1134 = vmatpush1.bf16.msra.mxu0 %v1115
          %1135 = vmatprep.subr.bf16.mxu0 0
          %1136 = vmatpush1.bf16.msra.mxu0 %v1114
          %1137 = vmatprep.subr.bf16.mxu0 0
          %1138 = vmatpush1.bf16.msra.mxu0 %v1113
          %1139 = vmatprep.subr.bf16.mxu0 0
          %1140 = vmatpush1.bf16.msra.mxu0 %v1112
          %1141 = vmatprep.subr.bf16.mxu0 0
          %1142 = vmatpush1.bf16.msra.mxu0 %v1111
          %1143 = vmatprep.subr.bf16.mxu0 0
          %1144 = vmatpush2.bf16.msra.mxu0 0
          %1145 = vmatprep.subr.bf16.mxu0 0
          %1146 = vmatpush2.bf16.msra.mxu0 0
          %1147 = vmatprep.subr.bf16.mxu0 0
          %1148 = vmatpush2.bf16.msra.mxu0 0
          %1149 = vmatprep.subr.bf16.mxu0 0
          %1150 = vmatpush2.bf16.msra.mxu0 0
          %1151 = vmatprep.subr.bf16.mxu0 0
          %1152 = vmatpush2.bf16.msra.mxu0 0
          %1153 = vmatprep.subr.bf16.mxu0 0
          %1154 = vmatpush2.bf16.msra.mxu0 0
          %1155 = vmatprep.subr.bf16.mxu0 0
          %1156 = vmatpush2.bf16.msra.mxu0 0
          %1157 = vmatprep.subr.bf16.mxu0 0
          %1158 = vmatpush2.bf16.msra.mxu0 0
          %1159 = vmatprep.mubr.bf16.mxu0 0
          %1160 = vmatmul.mubr.bf16.gmra.mxu0 %v1055
          %v1161 = vpop.f32.mrf.mxu0
          %v1162 = vadd.f32 %v1077, %v1161
          %v1163 = vpop.f32.mrf.mxu0
          %v1164 = vpop.f32.mrf.mxu0
          %v1165 = vadd.f32 %v1077, %v1164
          %v1166 = vpop.f32.mrf.mxu0
          %1167 = vdwg.mxu0
          %v1168 = vmax.f32 %v1162, 0.0
          %v1169 = vmax.f32 %v1165, 0.0
          %1170 = vst [vmem:[%s299] sm:$0xff] %v1168
          %1171 = vst [vmem:[%s299 + $0x8] sm:$0xff] %v1169
        $region71: #{_forward_core.5} parent=58 // pred_fallthru
          _
        %s1172 = smul.u32 2, %s20
        %p1173 = scmp.lt.s32.totalorder %s1172, 1
        %s1174 = scalar_select %p1173, %s1172, 1
        %s1175 = smul.addr %s1174, 8
        %s1176 = scalar_lea.vmem %s5, %s1175
        // Predicated region
        $region72: #{_forward_core.5} parent=58 // pred_check
          %p1177 = pneg %p163
        $region73: #{_forward_core.5} parent=58 // pred_check_branch
          %1179 = sbr.rel (%p1177) target = $region75
        $region74: #{_forward_core.5} parent=58 // pred_region
          %s1180 = smul.u32 2, %s20
        $region75: #{_forward_core.5} parent=58 // pred_fallthru
          _
        // Predicated region
        $region76: #{_forward_core.5} parent=58 // pred_check
          %p1181 = pneg %p163
        $region77: #{_forward_core.5} parent=58 // pred_check_branch
          %1183 = sbr.rel (%p1181) target = $region79
        $region78: #{_forward_core.5} parent=58 // pred_region
          %s1184 = smul.u32 2, %s20
          %p1185 = scmp.lt.s32.totalorder %s1184, 1
          %s1186 = scalar_select %p1185, %s1184, 1
          %s1187 = smul.addr %s1186, 8
          %s1188 = scalar_lea.vmem %s5, %s1187
        $region79: #{_forward_core.5} parent=58 // pred_fallthru
          _
      $region59: #{_forward_core.5} parent=5 // pred_fallthru
        _
      %p1189 = scmp.le.s32.totalorder 2, %s11
      // Predicated region
      $region80: #{_forward_core.5} parent=5 // pred_check
        %p1190 = pneg %p1189
      $region81: #{_forward_core.5} parent=5 // pred_check_branch
        %1192 = sbr.rel (%p1190) target = $region83
      $region82: #{_forward_core.5} parent=5 // pred_region
        %s1193 = ssub.s32 %s11, 2
      $region83: #{_forward_core.5} parent=5 // pred_fallthru
        _
    $region6: #{_forward_core.5} parent=1 // loop_footer
      %s15 = sadd.s32 1, %s11
    $region7: #{_forward_core.5} parent=1 // loop_footer_branch
      %10 = sbr.rel target = $region3
    $region8: #{_forward_core.5} parent=1 // loop_exit
      _

// kernel: _forward_core.7
$region0: #{_forward_core.7}
  #allocation0 [shape = 'u32[]', space=smem, size = 0x4, offset = 0x4, fixed_abs, tag = 'smem constant byte address 0x4 - core index']
  #allocation1 [shape = 'u32[144,128]{1,0:T(1,128)}', space=vmem, size = 0x12000, scoped, tag = 'internal scratch']
  #allocation2 [shape = 'f32[16,128]{1,0:T(8,128)}', space=vmem, size = 0x2000, scoped, tag = 'scratch operand']
  %s0 = inlined_call_operand.vmem [shape: bf16[16,7], index: 0, kind: input, shape index: {}]
  %s1 = inlined_call_operand.vmem [shape: bf16[7,128], index: 1, kind: input, shape index: {}]
  %s2 = inlined_call_operand.vmem [shape: f32[1,128], index: 2, kind: input, shape index: {}]
  %s3 = inlined_call_operand.vmem [shape: bf16[128,128], index: 3, kind: input, shape index: {}]
  %s4 = inlined_call_operand.vmem [shape: f32[1,128], index: 4, kind: input, shape index: {}]
  %s5 = inlined_call_operand.vmem [shape: f32[16,128], index: 5, kind: output, shape index: {}]
  %s6 = sld [smem:[#allocation0]]
  $region38: #{_forward_core.7} parent=0
    _
  %s8 = ssub.s32 1, %s6
  %s9 = scalar_select 0, %s8, %s6
  // Predicated region
  $region2: #{_forward_core.7} parent=0 // pred_check
    _
  $region3: #{_forward_core.7} parent=0 // pred_check_branch
    %11 = sbr.rel (0) target = $region5
  $region4: #{_forward_core.7} parent=0 // pred_region
    _
  $region5: #{_forward_core.7} parent=0 // pred_fallthru
    _
  // Predicated region
  $region6: #{_forward_core.7} parent=0 // pred_check
    _
  $region7: #{_forward_core.7} parent=0 // pred_check_branch
    %13 = sbr.rel (0) target = $region9
  $region8: #{_forward_core.7} parent=0 // pred_region
    _
  $region9: #{_forward_core.7} parent=0 // pred_fallthru
    _
  // Predicated region
  $region10: #{_forward_core.7} parent=0 // pred_check
    _
  $region11: #{_forward_core.7} parent=0 // pred_check_branch
    %15 = sbr.rel (0) target = $region13
  $region12: #{_forward_core.7} parent=0 // pred_region
    _
  $region13: #{_forward_core.7} parent=0 // pred_fallthru
    _
  // Predicated region
  $region14: #{_forward_core.7} parent=0 // pred_check
    _
  $region15: #{_forward_core.7} parent=0 // pred_check_branch
    %17 = sbr.rel (0) target = $region17
  $region16: #{_forward_core.7} parent=0 // pred_region
    _
  $region17: #{_forward_core.7} parent=0 // pred_fallthru
    _
  // Predicated region
  $region18: #{_forward_core.7} parent=0 // pred_check
    _
  $region19: #{_forward_core.7} parent=0 // pred_check_branch
    %19 = sbr.rel (0) target = $region21
  $region20: #{_forward_core.7} parent=0 // pred_region
    _
  $region21: #{_forward_core.7} parent=0 // pred_fallthru
    _
  %p21 = scmp.eq.s32.totalorder 0, 0
  // Predicated region
  $region22: #{_forward_core.7} parent=0 // pred_check
    %p22 = pneg %p21
  $region23: #{_forward_core.7} parent=0 // pred_check_branch
    %24 = sbr.rel (%p22) target = $region25
  $region24: #{_forward_core.7} parent=0 // pred_region
    %25 = vst [vmem:[#allocation2] sm:$0xff] 0.0
    %26 = vst [vmem:[#allocation2 + $0x8] sm:$0xff] 0.0
  $region25: #{_forward_core.7} parent=0 // pred_fallthru
    _
  %v27 = vld [vmem:[#allocation2] sm:$0xff]
  %v28 = vld [vmem:[#allocation2 + $0x8] sm:$0xff]
  %v29 = vld [vmem:[%s0] sm:$0xf]
  %v30 = vld [vmem:[%s0 + $0x4] sm:$0xf]
  %v31 = vld [vmem:[%s1] sm:$0xf]
  %v34 = vunpack.c.l.b16 %v29
  %v35 = vunpack.c.l.b16 %v30
  %v36 = vpack.c.b16 %v35, %v34
  %vm37 = vcmask 56320
  %v39 = vsel %vm37, %v36, 0
  %vm41 = vcmask 1042432
  %vm42 = vcmask 1043456
  %v43 = vsel %vm41, 4294967295, 65535
  %v44 = vsel %vm42, %v43, 0
  %v46 = vand.u32 %v31, %v44
  %48 = vmatprep.subr.bf16.mxu0 0
  %49 = vmatpush1.bf16.msra.mxu0 0
  %50 = vmatprep.subr.bf16.mxu0 0
  %51 = vmatpush1.bf16.msra.mxu0 0
  %52 = vmatprep.subr.bf16.mxu0 0
  %53 = vmatpush1.bf16.msra.mxu0 0
  %54 = vmatprep.subr.bf16.mxu0 0
  %55 = vmatpush1.bf16.msra.mxu0 0
  %56 = vmatprep.subr.bf16.mxu0 0
  %57 = vmatpush1.bf16.msra.mxu0 0
  %58 = vmatprep.subr.bf16.mxu0 0
  %59 = vmatpush1.bf16.msra.mxu0 0
  %60 = vmatprep.subr.bf16.mxu0 0
  %61 = vmatpush1.bf16.msra.mxu0 0
  %62 = vmatprep.subr.bf16.mxu0 0
  %63 = vmatpush1.bf16.msra.mxu0 %v46
  %64 = vmatprep.subr.bf16.mxu0 0
  %65 = vmatpush2.bf16.msra.mxu0 0
  %66 = vmatprep.subr.bf16.mxu0 0
  %67 = vmatpush2.bf16.msra.mxu0 0
  %68 = vmatprep.subr.bf16.mxu0 0
  %69 = vmatpush2.bf16.msra.mxu0 0
  %70 = vmatprep.subr.bf16.mxu0 0
  %71 = vmatpush2.bf16.msra.mxu0 0
  %72 = vmatprep.subr.bf16.mxu0 0
  %73 = vmatpush2.bf16.msra.mxu0 0
  %74 = vmatprep.subr.bf16.mxu0 0
  %75 = vmatpush2.bf16.msra.mxu0 0
  %76 = vmatprep.subr.bf16.mxu0 0
  %77 = vmatpush2.bf16.msra.mxu0 0
  %78 = vmatprep.subr.bf16.mxu0 0
  %79 = vmatpush2.bf16.msra.mxu0 0
  %80 = vmatprep.mubr.bf16.mxu0 0
  %81 = vmatmul.mubr.bf16.gmra.mxu0 %v39
  %v82 = vpop.f32.mrf.mxu0
  %v83 = vadd.f32 0.0, %v82
  %v84 = vpop.f32.mrf.mxu0
  %v85 = vpop.f32.mrf.mxu0
  %v86 = vadd.f32 0.0, %v85
  %v87 = vpop.f32.mrf.mxu0
  %88 = vdwg.mxu0
  %v89 = vadd.f32 %v27, %v83
  %v90 = vadd.f32 %v28, %v86
  %91 = vst [vmem:[#allocation2] sm:$0xff] %v89
  %92 = vst [vmem:[#allocation2 + $0x8] sm:$0xff] %v90
  // Predicated region
  $region26: #{_forward_core.7} parent=0 // pred_check
    %p93 = pneg %p21
  $region27: #{_forward_core.7} parent=0 // pred_check_branch
    %95 = sbr.rel (%p93) target = $region29
  $region28: #{_forward_core.7} parent=0 // pred_region
    %v96 = vld [vmem:[#allocation2] sm:$0xff]
    %v97 = vld [vmem:[#allocation2 + $0x8] sm:$0xff]
    %v98 = vld [vmem:[%s2] sm:$0x1]
    %v100 = vlaneseq
    %v101 = vshrl.u32 %v100, 7
    %v102 = vsub.s32 0, %v101
    %v103 = vrot.slane %v98, %v102
    %v105 = vadd.f32 %v96, %v103
    %v106 = vadd.f32 %v97, %v103
    %v107 = vmax.f32 %v105, 0.0
    %v108 = vmax.f32 %v106, 0.0
    %v109 = vpack.c.bf16 %v108, %v107
    %v110 = vld [vmem:[%s3] sm:$0xf]
    %v111 = vld [vmem:[%s3 + $0x4] sm:$0xf]
    %v112 = vld [vmem:[%s3 + $0x8] sm:$0xf]
    %v113 = vld [vmem:[%s3 + $0xc] sm:$0xf]
    %v114 = vld [vmem:[%s3 + $0x10] sm:$0xf]
    %v115 = vld [vmem:[%s3 + $0x14] sm:$0xf]
    %v116 = vld [vmem:[%s3 + $0x18] sm:$0xf]
    %v117 = vld [vmem:[%s3 + $0x1c] sm:$0xf]
    %v118 = vld [vmem:[%s3 + $0x20] sm:$0xf]
    %v119 = vld [vmem:[%s3 + $0x24] sm:$0xf]
    %v120 = vld [vmem:[%s3 + $0x28] sm:$0xf]
    %v121 = vld [vmem:[%s3 + $0x2c] sm:$0xf]
    %v122 = vld [vmem:[%s3 + $0x30] sm:$0xf]
    %v123 = vld [vmem:[%s3 + $0x34] sm:$0xf]
    %v124 = vld [vmem:[%s3 + $0x38] sm:$0xf]
    %v125 = vld [vmem:[%s3 + $0x3c] sm:$0xf]
    %v126 = vld [vmem:[%s4] sm:$0x1]
    %v128 = vlaneseq
    %v129 = vshrl.u32 %v128, 7
    %v130 = vsub.s32 0, %v129
    %v131 = vrot.slane %v126, %v130
    %v149 = vunpack.c.l.b16 %v110
    %v150 = vunpack.c.l.b16 %v111
    %v151 = vunpack.c.l.b16 %v112
    %v152 = vunpack.c.l.b16 %v113
    %v153 = vunpack.c.l.b16 %v114
    %v154 = vunpack.c.l.b16 %v115
    %v155 = vunpack.c.l.b16 %v116
    %v156 = vunpack.c.l.b16 %v117
    %v157 = vunpack.c.l.b16 %v118
    %v158 = vunpack.c.l.b16 %v119
    %v159 = vunpack.c.l.b16 %v120
    %v160 = vunpack.c.l.b16 %v121
    %v161 = vunpack.c.l.b16 %v122
    %v162 = vunpack.c.l.b16 %v123
    %v163 = vunpack.c.l.b16 %v124
    %v164 = vunpack.c.l.b16 %v125
    %v165 = vpack.c.b16 %v150, %v149
    %v166 = vpack.c.b16 %v152, %v151
    %v167 = vpack.c.b16 %v154, %v153
    %v168 = vpack.c.b16 %v156, %v155
    %v169 = vpack.c.b16 %v158, %v157
    %v170 = vpack.c.b16 %v160, %v159
    %v171 = vpack.c.b16 %v162, %v161
    %v172 = vpack.c.b16 %v164, %v163
    %181 = vmatprep.subr.bf16.mxu0 0
    %182 = vmatpush1.bf16.msra.mxu0 %v172
    %183 = vmatprep.subr.bf16.mxu0 0
    %184 = vmatpush1.bf16.msra.mxu0 %v171
    %185 = vmatprep.subr.bf16.mxu0 0
    %186 = vmatpush1.bf16.msra.mxu0 %v170
    %187 = vmatprep.subr.bf16.mxu0 0
    %188 = vmatpush1.bf16.msra.mxu0 %v169
    %189 = vmatprep.subr.bf16.mxu0 0
    %190 = vmatpush1.bf16.msra.mxu0 %v168
    %191 = vmatprep.subr.bf16.mxu0 0
    %192 = vmatpush1.bf16.msra.mxu0 %v167
    %193 = vmatprep.subr.bf16.mxu0 0
    %194 = vmatpush1.bf16.msra.mxu0 %v166
    %195 = vmatprep.subr.bf16.mxu0 0
    %196 = vmatpush1.bf16.msra.mxu0 %v165
    %197 = vmatprep.subr.bf16.mxu0 0
    %198 = vmatpush2.bf16.msra.mxu0 0
    %199 = vmatprep.subr.bf16.mxu0 0
    %200 = vmatpush2.bf16.msra.mxu0 0
    %201 = vmatprep.subr.bf16.mxu0 0
    %202 = vmatpush2.bf16.msra.mxu0 0
    %203 = vmatprep.subr.bf16.mxu0 0
    %204 = vmatpush2.bf16.msra.mxu0 0
    %205 = vmatprep.subr.bf16.mxu0 0
    %206 = vmatpush2.bf16.msra.mxu0 0
    %207 = vmatprep.subr.bf16.mxu0 0
    %208 = vmatpush2.bf16.msra.mxu0 0
    %209 = vmatprep.subr.bf16.mxu0 0
    %210 = vmatpush2.bf16.msra.mxu0 0
    %211 = vmatprep.subr.bf16.mxu0 0
    %212 = vmatpush2.bf16.msra.mxu0 0
    %213 = vmatprep.mubr.bf16.mxu0 0
    %214 = vmatmul.mubr.bf16.gmra.mxu0 %v109
    %v215 = vpop.f32.mrf.mxu0
    %v216 = vadd.f32 %v131, %v215
    %v217 = vpop.f32.mrf.mxu0
    %v218 = vpop.f32.mrf.mxu0
    %v219 = vadd.f32 %v131, %v218
    %v220 = vpop.f32.mrf.mxu0
    %221 = vdwg.mxu0
    %v222 = vmax.f32 %v216, 0.0
    %v223 = vmax.f32 %v219, 0.0
    %224 = vst [vmem:[%s5] sm:$0xff] %v222
    %225 = vst [vmem:[%s5 + $0x8] sm:$0xff] %v223
  $region29: #{_forward_core.7} parent=0 // pred_fallthru
    _
  // Predicated region
  $region30: #{_forward_core.7} parent=0 // pred_check
    _
  $region31: #{_forward_core.7} parent=0 // pred_check_branch
    %227 = sbr.rel (0) target = $region33
  $region32: #{_forward_core.7} parent=0 // pred_region
    _
  $region33: #{_forward_core.7} parent=0 // pred_fallthru
    _
  // Predicated region
  $region34: #{_forward_core.7} parent=0 // pred_check
    _
  $region35: #{_forward_core.7} parent=0 // pred_check_branch
    %229 = sbr.rel (0) target = $region37
  $region36: #{_forward_core.7} parent=0 // pred_region
    _
  $region37: #{_forward_core.7} parent=0 // pred_fallthru
    _

</llo_original>
